<compile_context>
chip_gen: v6e
topology: v6e:2x2x1
jax: 0.10.0
libtpu: 0.0.40
codegen_flags: <defaults>
</compile_context>

<pallas_src>
import functools

import jax
import jax.numpy as jnp
from jax.experimental import pallas as pl
from jax.experimental.pallas import tpu as pltpu


def _lstm_kernel(x_ref, wih_ref, whh_ref, b_ref, fcw_ref, fcb_ref, out_ref,
                 seq_buf, gx_buf, *, hidden_size, num_layers, seq_len, batch,
                 neg_slope):
    """One grid step = one LSTM layer (full unrolled timestep loop inside)."""
    l = pl.program_id(0)
    H = hidden_size
    S = seq_len
    B = batch  # padded batch (multiple of 8)

    # Stage the (zero-padded, time-major, flattened) external input into the
    # sequence scratch once; deeper layers read the previous layer's output
    # from the same buffer (overwritten in place).
    @pl.when(l == 0)
    def _():
        seq_buf[...] = x_ref[...]

    # Non-recurrent input projection for ALL timesteps at once, bias folded in:
    #   gx[t*B:(t+1)*B, :] = x_layer[t] @ W_ih + (b_ih + b_hh)
    gx_buf[...] = (
        jnp.dot(seq_buf[...], wih_ref[0], preferred_element_type=jnp.float32)
        + b_ref[0]
    )

    whh = whh_ref[0]  # (H, 4H), hoisted out of the timestep loop

    def step(t, carry):
        h_prev, c_prev = carry
        off = t * B  # sublane-aligned (B is a multiple of 8)
        # Only the recurrent matmul lives on the serial critical path.
        gates = (
            jnp.dot(h_prev, whh, preferred_element_type=jnp.float32)
            + gx_buf[pl.ds(off, B), :]
        )  # (B, 4H), PyTorch gate order [i | f | g | o]

        # Full-vreg transcendentals (EUP), then slice.
        sig = jax.nn.sigmoid(gates)
        tnh = jnp.tanh(gates)
        i_g = sig[:, 0 * H:1 * H]
        f_g = sig[:, 1 * H:2 * H]
        g_g = tnh[:, 2 * H:3 * H]
        o_g = sig[:, 3 * H:4 * H]

        c_new = f_g * c_prev + i_g * g_g
        h_new = o_g * jnp.tanh(c_new)

        # Layer l's output at time t replaces layer l-1's (input for layer l+1).
        seq_buf[pl.ds(off, B), :] = h_new
        return h_new, c_new

    zeros = jnp.zeros((B, H), jnp.float32)
    h_last, _ = jax.lax.fori_loop(0, S, step, (zeros, zeros), unroll=True)

    # Final layer: fc (H -> 1) as a VPU reduction + LeakyReLU, lane-dense store.
    @pl.when(l == num_layers - 1)
    def _():
        y = jnp.sum(h_last * fcw_ref[...], axis=-1, keepdims=True) + fcb_ref[...]
        y = jnp.where(y >= 0, y, neg_slope * y)          # (B, 1)
        out_ref[...] = jnp.broadcast_to(y, out_ref.shape)


def lstm_forward_pallas(x, params, hidden_size, num_layers):
    """x: (B, S, ...) with prod(trailing dims) == 4, float32."""
    B = x.shape[0]
    S = x.shape[1]
    x = x.reshape(B, S, -1).astype(jnp.float32)        # (B, S, 4)
    in_feat = x.shape[-1]
    H = hidden_size
    L = num_layers
    assert H >= in_feat

    # Pad batch to a multiple of 8 (f32 sublane count); padded rows are zero
    # and get discarded after the kernel.
    B_pad = max(8, ((B + 7) // 8) * 8)

    # Time-major, batch-padded, feature-zero-padded, flattened to (S*B_pad, H):
    # row index = t * B_pad + b.
    x_tm = jnp.transpose(x, (1, 0, 2))                  # (S, B, in_feat)
    x_full = jnp.zeros((S, B_pad, H), jnp.float32).at[:, :B, :in_feat].set(x_tm)
    x_flat = x_full.reshape(S * B_pad, H)

    # Stack per-layer weights, transposed for right-multiplication, with the
    # layer-0 input weight zero-padded from (4, 4H) to (H, 4H).
    wih_list, whh_list, b_list = [], [], []
    for l in range(L):
        w_ih = params[f"w_ih_{l}"]                      # (4H, in_l)
        w_hh = params[f"w_hh_{l}"]                      # (4H, H)
        b = params[f"b_ih_{l}"] + params[f"b_hh_{l}"]   # (4H,)
        w_ih_t = jnp.zeros((H, 4 * H), jnp.float32).at[: w_ih.shape[1], :].set(w_ih.T)
        wih_list.append(w_ih_t)
        whh_list.append(w_hh.T)
        b_list.append(b.reshape(1, 4 * H))
    wih = jnp.stack(wih_list)            # (L, H, 4H)
    whh = jnp.stack(whh_list)            # (L, H, 4H)
    bias = jnp.stack(b_list)             # (L, 1, 4H)

    fc_w = params["fc_w"].reshape(1, H)  # (1, H) row for the VPU reduction
    fc_b = params["fc_b"].reshape(1, 1)  # (1, 1)

    kernel = functools.partial(
        _lstm_kernel,
        hidden_size=H,
        num_layers=L,
        seq_len=S,
        batch=B_pad,
        neg_slope=0.01,
    )

    out = pl.pallas_call(
        kernel,
        out_shape=jax.ShapeDtypeStruct((B_pad, 128), jnp.float32),
        grid_spec=pltpu.PrefetchScalarGridSpec(
            num_scalar_prefetch=0,
            grid=(L,),
            in_specs=[
                pl.BlockSpec((S * B_pad, H), lambda l: (0, 0)),       # x_flat
                pl.BlockSpec((1, H, 4 * H), lambda l: (l, 0, 0)),     # wih
                pl.BlockSpec((1, H, 4 * H), lambda l: (l, 0, 0)),     # whh
                pl.BlockSpec((1, 1, 4 * H), lambda l: (l, 0, 0)),     # bias
                pl.BlockSpec((1, H), lambda l: (0, 0)),               # fc_w
                pl.BlockSpec((1, 1), lambda l: (0, 0)),               # fc_b
            ],
            out_specs=pl.BlockSpec((B_pad, 128), lambda l: (0, 0)),
            scratch_shapes=[
                pltpu.VMEM((S * B_pad, H), jnp.float32),       # sequence buffer
                pltpu.VMEM((S * B_pad, 4 * H), jnp.float32),   # per-layer gates_x
            ],
        ),
        compiler_params=pltpu.CompilerParams(
            # Layers are a serial recurrence over the shared seq_buf scratch:
            # the grid axis MUST stay "arbitrary".
            dimension_semantics=("arbitrary",)
        ),
    )(x_flat, wih, whh, bias, fc_w, fc_b)

    return out[:B, :1]


def lstm_forward_ref(x, params, hidden_size, num_layers):
    """Pure-JAX reference mirroring torch.nn.LSTM + Linear + LeakyReLU."""
    B = x.shape[0]
    S = x.shape[1]
    x = x.reshape(B, S, -1).astype(jnp.float32)
    H = hidden_size
    inp = x
    for l in range(num_layers):
        w_ih = params[f"w_ih_{l}"]
        w_hh = params[f"w_hh_{l}"]
        b = params[f"b_ih_{l}"] + params[f"b_hh_{l}"]
        h = jnp.zeros((B, H), jnp.float32)
        c = jnp.zeros((B, H), jnp.float32)
        outs = []
        for t in range(S):
            g = inp[:, t] @ w_ih.T + h @ w_hh.T + b
            i_g = jax.nn.sigmoid(g[:, 0 * H:1 * H])
            f_g = jax.nn.sigmoid(g[:, 1 * H:2 * H])
            g_g = jnp.tanh(g[:, 2 * H:3 * H])
            o_g = jax.nn.sigmoid(g[:, 3 * H:4 * H])
            c = f_g * c + i_g * g_g
            h = o_g * jnp.tanh(c)
            outs.append(h)
        inp = jnp.stack(outs, axis=1)
    y = inp[:, -1] @ params["fc_w"].T + params["fc_b"]
    return jnp.where(y >= 0, y, 0.01 * y)


def init_params(key, hidden_size, num_layers, input_size=4):
    H = hidden_size
    params = {}
    bound = 1.0 / jnp.sqrt(H)
    for l in range(num_layers):
        in_l = input_size if l == 0 else H
        key, k1, k2, k3, k4 = jax.random.split(key, 5)
        params[f"w_ih_{l}"] = jax.random.uniform(k1, (4 * H, in_l), jnp.float32, -bound, bound)
        params[f"w_hh_{l}"] = jax.random.uniform(k2, (4 * H, H), jnp.float32, -bound, bound)
        params[f"b_ih_{l}"] = jax.random.uniform(k3, (4 * H,), jnp.float32, -bound, bound)
        params[f"b_hh_{l}"] = jax.random.uniform(k4, (4 * H,), jnp.float32, -bound, bound)
    key, k1, k2 = jax.random.split(key, 3)
    fb = 1.0 / jnp.sqrt(H)
    params["fc_w"] = jax.random.uniform(k1, (1, H), jnp.float32, -fb, fb)
    params["fc_b"] = jax.random.uniform(k2, (1,), jnp.float32, -fb, fb)
    return params


if __name__ == "__main__":
    B, S = 2, 8
    HIDDEN = 32
    NUM_LAYERS = 2

    key = jax.random.PRNGKey(0)
    kx, kp = jax.random.split(key)
    # (B, S, 2, 2) -> module views it as (B, S, 4)
    x = jax.random.normal(kx, (B, S, 2, 2), jnp.float32)
    params = init_params(kp, HIDDEN, NUM_LAYERS, input_size=4)

    out = lstm_forward_pallas(x, params, HIDDEN, NUM_LAYERS)
    out = jax.block_until_ready(out)

    ref = lstm_forward_ref(x, params, HIDDEN, NUM_LAYERS)
    assert out.shape == (B, 1)
    assert jnp.allclose(out, ref, atol=1e-4, rtol=1e-4), (out, ref)

    print("KERNEL_OK")
</pallas_src>

<mosaic_0001>
module attributes {stable_mosaic.version = 11 : i64} {
  func.func @_lstm_kernel(%arg0: i32, %arg1: memref<64x32xf32, #tpu.memory_space<vmem>>, %arg2: memref<1x32x128xf32, #tpu.memory_space<vmem>>, %arg3: memref<1x32x128xf32, #tpu.memory_space<vmem>>, %arg4: memref<1x1x128xf32, #tpu.memory_space<vmem>>, %arg5: memref<1x32xf32, #tpu.memory_space<vmem>>, %arg6: memref<1x1xf32, #tpu.memory_space<vmem>>, %arg7: memref<8x128xf32, #tpu.memory_space<vmem>>, %arg8: memref<64x32xf32, #tpu.memory_space<vmem>>, %arg9: memref<64x128xf32, #tpu.memory_space<vmem>>) attributes {dimension_semantics = [#tpu.dimension_semantics<arbitrary>], iteration_bounds = array<i64: 2>, scalar_prefetch = 0 : i64, scratch_operands = 2 : i64, tpu.core_type = #tpu.core_type<tc>, window_params = [{pipeline_mode = #tpu.pipeline_mode<synchronous>, transform_indices = @transform_0, window_bounds = array<i64: 64, 32>}, {transform_indices = @transform_1, window_bounds = array<i64: 1, 32, 128>}, {transform_indices = @transform_2, window_bounds = array<i64: 1, 32, 128>}, {transform_indices = @transform_3, window_bounds = array<i64: 1, 1, 128>}, {pipeline_mode = #tpu.pipeline_mode<synchronous>, transform_indices = @transform_4, window_bounds = array<i64: 1, 32>}, {pipeline_mode = #tpu.pipeline_mode<synchronous>, transform_indices = @transform_5, window_bounds = array<i64: 1, 1>}, {pipeline_mode = #tpu.pipeline_mode<synchronous>, transform_indices = @transform_6, window_bounds = array<i64: 8, 128>}]} {
    %c0_i32 = arith.constant 0 : i32
    %0 = arith.cmpi eq, %arg0, %c0_i32 : i32
    %1 = arith.extui %0 : i1 to i32
    %c0_i32_0 = arith.constant 0 : i32
    %2 = arith.cmpi ne, %1, %c0_i32_0 : i32
    scf.if %2 {
      %c0_57 = arith.constant 0 : index
      %c0_58 = arith.constant 0 : index
      %194 = vector.load %arg1[%c0_57, %c0_58] : memref<64x32xf32, #tpu.memory_space<vmem>>, vector<64x32xf32>
      %c0_59 = arith.constant 0 : index
      %c0_60 = arith.constant 0 : index
      %195 = vector.load %arg8[%c0_59, %c0_60] : memref<64x32xf32, #tpu.memory_space<vmem>>, vector<64x32xf32>
      tpu.vector_store %arg8[%c0_59, %c0_60], %194 {strides = array<i32>} : memref<64x32xf32, #tpu.memory_space<vmem>>, vector<64x32xf32>,
    } else {
    }
    %c0 = arith.constant 0 : index
    %c0_1 = arith.constant 0 : index
    %3 = vector.load %arg8[%c0, %c0_1] : memref<64x32xf32, #tpu.memory_space<vmem>>, vector<64x32xf32>
    %c0_2 = arith.constant 0 : index
    %c0_3 = arith.constant 0 : index
    %c0_4 = arith.constant 0 : index
    %4 = vector.load %arg2[%c0_2, %c0_3, %c0_4] : memref<1x32x128xf32, #tpu.memory_space<vmem>>, vector<1x32x128xf32>
    %5 = vector.shape_cast %4 : vector<1x32x128xf32> to vector<32x128xf32>
    %cst = arith.constant dense<0.000000e+00> : vector<64x128xf32>
    %6 = tpu.matmul %3, %5, %cst {dimension_numbers = #tpu.dot_dimension_numbers<[1], [0], [0], [1], [0, 0, 1, 1], [], []>} : vector<64x32xf32>, vector<32x128xf32>, vector<64x128xf32> -> vector<64x128xf32>
    %c0_5 = arith.constant 0 : index
    %c0_6 = arith.constant 0 : index
    %c0_7 = arith.constant 0 : index
    %7 = vector.load %arg4[%c0_5, %c0_6, %c0_7] : memref<1x1x128xf32, #tpu.memory_space<vmem>>, vector<1x1x128xf32>
    %8 = vector.shape_cast %7 : vector<1x1x128xf32> to vector<1x128xf32>
    %9 = vector.broadcast %8 : vector<1x128xf32> to vector<64x128xf32>
    %10 = arith.addf %6, %9 : vector<64x128xf32>
    %c0_8 = arith.constant 0 : index
    %c0_9 = arith.constant 0 : index
    %11 = vector.load %arg9[%c0_8, %c0_9] : memref<64x128xf32, #tpu.memory_space<vmem>>, vector<64x128xf32>
    tpu.vector_store %arg9[%c0_8, %c0_9], %10 {strides = array<i32>} : memref<64x128xf32, #tpu.memory_space<vmem>>, vector<64x128xf32>,
    %c0_10 = arith.constant 0 : index
    %c0_11 = arith.constant 0 : index
    %c0_12 = arith.constant 0 : index
    %12 = vector.load %arg3[%c0_10, %c0_11, %c0_12] : memref<1x32x128xf32, #tpu.memory_space<vmem>>, vector<1x32x128xf32>
    %13 = vector.shape_cast %12 : vector<1x32x128xf32> to vector<32x128xf32>
    %cst_13 = arith.constant 0.000000e+00 : f32
    %14 = vector.broadcast %cst_13 : f32 to vector<8x32xf32>
    %c0_i32_14 = arith.constant 0 : i32
    %c8_i32 = arith.constant 8 : i32
    %15 = arith.muli %c0_i32_14, %c8_i32 : i32
    %cst_15 = arith.constant dense<0.000000e+00> : vector<8x128xf32>
    %16 = tpu.matmul %14, %13, %cst_15 {dimension_numbers = #tpu.dot_dimension_numbers<[1], [0], [0], [1], [0, 0, 1, 1], [], []>} : vector<8x32xf32>, vector<32x128xf32>, vector<8x128xf32> -> vector<8x128xf32>
    %17 = arith.index_cast %15 : i32 to index
    %c0_16 = arith.constant 0 : index
    %18 = vector.load %arg9[%17, %c0_16] : memref<64x128xf32, #tpu.memory_space<vmem>>, vector<8x128xf32>
    %19 = arith.addf %16, %18 : vector<8x128xf32>
    %20 = arith.negf %19 : vector<8x128xf32>
    %21 = math.exp %20 : vector<8x128xf32>
    %cst_17 = arith.constant 1.000000e+00 : f32
    %22 = vector.broadcast %cst_17 : f32 to vector<8x128xf32>
    %23 = arith.addf %22, %21 : vector<8x128xf32>
    %24 = arith.divf %22, %23 : vector<8x128xf32>
    %25 = math.tanh %19 : vector<8x128xf32>
    %26 = vector.extract_strided_slice %24 {offsets = [0, 0], sizes = [8, 32], strides = [1, 1]} : vector<8x128xf32> to vector<8x32xf32>
    %27 = vector.extract_strided_slice %24 {offsets = [0, 32], sizes = [8, 32], strides = [1, 1]} : vector<8x128xf32> to vector<8x32xf32>
    %28 = vector.extract_strided_slice %25 {offsets = [0, 64], sizes = [8, 32], strides = [1, 1]} : vector<8x128xf32> to vector<8x32xf32>
    %29 = vector.extract_strided_slice %24 {offsets = [0, 96], sizes = [8, 32], strides = [1, 1]} : vector<8x128xf32> to vector<8x32xf32>
    %30 = arith.mulf %27, %14 : vector<8x32xf32>
    %31 = arith.mulf %26, %28 : vector<8x32xf32>
    %32 = arith.addf %30, %31 : vector<8x32xf32>
    %33 = math.tanh %32 : vector<8x32xf32>
    %34 = arith.mulf %29, %33 : vector<8x32xf32>
    %35 = arith.index_cast %15 : i32 to index
    %c0_18 = arith.constant 0 : index
    %36 = vector.load %arg8[%35, %c0_18] : memref<64x32xf32, #tpu.memory_space<vmem>>, vector<8x32xf32>
    tpu.vector_store %arg8[%35, %c0_18], %34 {strides = array<i32>} : memref<64x32xf32, #tpu.memory_space<vmem>>, vector<8x32xf32>,
    %c1_i32 = arith.constant 1 : i32
    %c8_i32_19 = arith.constant 8 : i32
    %37 = arith.muli %c1_i32, %c8_i32_19 : i32
    %cst_20 = arith.constant dense<0.000000e+00> : vector<8x128xf32>
    %38 = tpu.matmul %34, %13, %cst_20 {dimension_numbers = #tpu.dot_dimension_numbers<[1], [0], [0], [1], [0, 0, 1, 1], [], []>} : vector<8x32xf32>, vector<32x128xf32>, vector<8x128xf32> -> vector<8x128xf32>
    %39 = arith.index_cast %37 : i32 to index
    %c0_21 = arith.constant 0 : index
    %40 = vector.load %arg9[%39, %c0_21] : memref<64x128xf32, #tpu.memory_space<vmem>>, vector<8x128xf32>
    %41 = arith.addf %38, %40 : vector<8x128xf32>
    %42 = arith.negf %41 : vector<8x128xf32>
    %43 = math.exp %42 : vector<8x128xf32>
    %cst_22 = arith.constant 1.000000e+00 : f32
    %44 = vector.broadcast %cst_22 : f32 to vector<8x128xf32>
    %45 = arith.addf %44, %43 : vector<8x128xf32>
    %46 = arith.divf %44, %45 : vector<8x128xf32>
    %47 = math.tanh %41 : vector<8x128xf32>
    %48 = vector.extract_strided_slice %46 {offsets = [0, 0], sizes = [8, 32], strides = [1, 1]} : vector<8x128xf32> to vector<8x32xf32>
    %49 = vector.extract_strided_slice %46 {offsets = [0, 32], sizes = [8, 32], strides = [1, 1]} : vector<8x128xf32> to vector<8x32xf32>
    %50 = vector.extract_strided_slice %47 {offsets = [0, 64], sizes = [8, 32], strides = [1, 1]} : vector<8x128xf32> to vector<8x32xf32>
    %51 = vector.extract_strided_slice %46 {offsets = [0, 96], sizes = [8, 32], strides = [1, 1]} : vector<8x128xf32> to vector<8x32xf32>
    %52 = arith.mulf %49, %32 : vector<8x32xf32>
    %53 = arith.mulf %48, %50 : vector<8x32xf32>
    %54 = arith.addf %52, %53 : vector<8x32xf32>
    %55 = math.tanh %54 : vector<8x32xf32>
    %56 = arith.mulf %51, %55 : vector<8x32xf32>
    %57 = arith.index_cast %37 : i32 to index
    %c0_23 = arith.constant 0 : index
    %58 = vector.load %arg8[%57, %c0_23] : memref<64x32xf32, #tpu.memory_space<vmem>>, vector<8x32xf32>
    tpu.vector_store %arg8[%57, %c0_23], %56 {strides = array<i32>} : memref<64x32xf32, #tpu.memory_space<vmem>>, vector<8x32xf32>,
    %c2_i32 = arith.constant 2 : i32
    %c8_i32_24 = arith.constant 8 : i32
    %59 = arith.muli %c2_i32, %c8_i32_24 : i32
    %cst_25 = arith.constant dense<0.000000e+00> : vector<8x128xf32>
    %60 = tpu.matmul %56, %13, %cst_25 {dimension_numbers = #tpu.dot_dimension_numbers<[1], [0], [0], [1], [0, 0, 1, 1], [], []>} : vector<8x32xf32>, vector<32x128xf32>, vector<8x128xf32> -> vector<8x128xf32>
    %61 = arith.index_cast %59 : i32 to index
    %c0_26 = arith.constant 0 : index
    %62 = vector.load %arg9[%61, %c0_26] : memref<64x128xf32, #tpu.memory_space<vmem>>, vector<8x128xf32>
    %63 = arith.addf %60, %62 : vector<8x128xf32>
    %64 = arith.negf %63 : vector<8x128xf32>
    %65 = math.exp %64 : vector<8x128xf32>
    %cst_27 = arith.constant 1.000000e+00 : f32
    %66 = vector.broadcast %cst_27 : f32 to vector<8x128xf32>
    %67 = arith.addf %66, %65 : vector<8x128xf32>
    %68 = arith.divf %66, %67 : vector<8x128xf32>
    %69 = math.tanh %63 : vector<8x128xf32>
    %70 = vector.extract_strided_slice %68 {offsets = [0, 0], sizes = [8, 32], strides = [1, 1]} : vector<8x128xf32> to vector<8x32xf32>
    %71 = vector.extract_strided_slice %68 {offsets = [0, 32], sizes = [8, 32], strides = [1, 1]} : vector<8x128xf32> to vector<8x32xf32>
    %72 = vector.extract_strided_slice %69 {offsets = [0, 64], sizes = [8, 32], strides = [1, 1]} : vector<8x128xf32> to vector<8x32xf32>
    %73 = vector.extract_strided_slice %68 {offsets = [0, 96], sizes = [8, 32], strides = [1, 1]} : vector<8x128xf32> to vector<8x32xf32>
    %74 = arith.mulf %71, %54 : vector<8x32xf32>
    %75 = arith.mulf %70, %72 : vector<8x32xf32>
    %76 = arith.addf %74, %75 : vector<8x32xf32>
    %77 = math.tanh %76 : vector<8x32xf32>
    %78 = arith.mulf %73, %77 : vector<8x32xf32>
    %79 = arith.index_cast %59 : i32 to index
    %c0_28 = arith.constant 0 : index
    %80 = vector.load %arg8[%79, %c0_28] : memref<64x32xf32, #tpu.memory_space<vmem>>, vector<8x32xf32>
    tpu.vector_store %arg8[%79, %c0_28], %78 {strides = array<i32>} : memref<64x32xf32, #tpu.memory_space<vmem>>, vector<8x32xf32>,
    %c3_i32 = arith.constant 3 : i32
    %c8_i32_29 = arith.constant 8 : i32
    %81 = arith.muli %c3_i32, %c8_i32_29 : i32
    %cst_30 = arith.constant dense<0.000000e+00> : vector<8x128xf32>
    %82 = tpu.matmul %78, %13, %cst_30 {dimension_numbers = #tpu.dot_dimension_numbers<[1], [0], [0], [1], [0, 0, 1, 1], [], []>} : vector<8x32xf32>, vector<32x128xf32>, vector<8x128xf32> -> vector<8x128xf32>
    %83 = arith.index_cast %81 : i32 to index
    %c0_31 = arith.constant 0 : index
    %84 = vector.load %arg9[%83, %c0_31] : memref<64x128xf32, #tpu.memory_space<vmem>>, vector<8x128xf32>
    %85 = arith.addf %82, %84 : vector<8x128xf32>
    %86 = arith.negf %85 : vector<8x128xf32>
    %87 = math.exp %86 : vector<8x128xf32>
    %cst_32 = arith.constant 1.000000e+00 : f32
    %88 = vector.broadcast %cst_32 : f32 to vector<8x128xf32>
    %89 = arith.addf %88, %87 : vector<8x128xf32>
    %90 = arith.divf %88, %89 : vector<8x128xf32>
    %91 = math.tanh %85 : vector<8x128xf32>
    %92 = vector.extract_strided_slice %90 {offsets = [0, 0], sizes = [8, 32], strides = [1, 1]} : vector<8x128xf32> to vector<8x32xf32>
    %93 = vector.extract_strided_slice %90 {offsets = [0, 32], sizes = [8, 32], strides = [1, 1]} : vector<8x128xf32> to vector<8x32xf32>
    %94 = vector.extract_strided_slice %91 {offsets = [0, 64], sizes = [8, 32], strides = [1, 1]} : vector<8x128xf32> to vector<8x32xf32>
    %95 = vector.extract_strided_slice %90 {offsets = [0, 96], sizes = [8, 32], strides = [1, 1]} : vector<8x128xf32> to vector<8x32xf32>
    %96 = arith.mulf %93, %76 : vector<8x32xf32>
    %97 = arith.mulf %92, %94 : vector<8x32xf32>
    %98 = arith.addf %96, %97 : vector<8x32xf32>
    %99 = math.tanh %98 : vector<8x32xf32>
    %100 = arith.mulf %95, %99 : vector<8x32xf32>
    %101 = arith.index_cast %81 : i32 to index
    %c0_33 = arith.constant 0 : index
    %102 = vector.load %arg8[%101, %c0_33] : memref<64x32xf32, #tpu.memory_space<vmem>>, vector<8x32xf32>
    tpu.vector_store %arg8[%101, %c0_33], %100 {strides = array<i32>} : memref<64x32xf32, #tpu.memory_space<vmem>>, vector<8x32xf32>,
    %c4_i32 = arith.constant 4 : i32
    %c8_i32_34 = arith.constant 8 : i32
    %103 = arith.muli %c4_i32, %c8_i32_34 : i32
    %cst_35 = arith.constant dense<0.000000e+00> : vector<8x128xf32>
    %104 = tpu.matmul %100, %13, %cst_35 {dimension_numbers = #tpu.dot_dimension_numbers<[1], [0], [0], [1], [0, 0, 1, 1], [], []>} : vector<8x32xf32>, vector<32x128xf32>, vector<8x128xf32> -> vector<8x128xf32>
    %105 = arith.index_cast %103 : i32 to index
    %c0_36 = arith.constant 0 : index
    %106 = vector.load %arg9[%105, %c0_36] : memref<64x128xf32, #tpu.memory_space<vmem>>, vector<8x128xf32>
    %107 = arith.addf %104, %106 : vector<8x128xf32>
    %108 = arith.negf %107 : vector<8x128xf32>
    %109 = math.exp %108 : vector<8x128xf32>
    %cst_37 = arith.constant 1.000000e+00 : f32
    %110 = vector.broadcast %cst_37 : f32 to vector<8x128xf32>
    %111 = arith.addf %110, %109 : vector<8x128xf32>
    %112 = arith.divf %110, %111 : vector<8x128xf32>
    %113 = math.tanh %107 : vector<8x128xf32>
    %114 = vector.extract_strided_slice %112 {offsets = [0, 0], sizes = [8, 32], strides = [1, 1]} : vector<8x128xf32> to vector<8x32xf32>
    %115 = vector.extract_strided_slice %112 {offsets = [0, 32], sizes = [8, 32], strides = [1, 1]} : vector<8x128xf32> to vector<8x32xf32>
    %116 = vector.extract_strided_slice %113 {offsets = [0, 64], sizes = [8, 32], strides = [1, 1]} : vector<8x128xf32> to vector<8x32xf32>
    %117 = vector.extract_strided_slice %112 {offsets = [0, 96], sizes = [8, 32], strides = [1, 1]} : vector<8x128xf32> to vector<8x32xf32>
    %118 = arith.mulf %115, %98 : vector<8x32xf32>
    %119 = arith.mulf %114, %116 : vector<8x32xf32>
    %120 = arith.addf %118, %119 : vector<8x32xf32>
    %121 = math.tanh %120 : vector<8x32xf32>
    %122 = arith.mulf %117, %121 : vector<8x32xf32>
    %123 = arith.index_cast %103 : i32 to index
    %c0_38 = arith.constant 0 : index
    %124 = vector.load %arg8[%123, %c0_38] : memref<64x32xf32, #tpu.memory_space<vmem>>, vector<8x32xf32>
    tpu.vector_store %arg8[%123, %c0_38], %122 {strides = array<i32>} : memref<64x32xf32, #tpu.memory_space<vmem>>, vector<8x32xf32>,
    %c5_i32 = arith.constant 5 : i32
    %c8_i32_39 = arith.constant 8 : i32
    %125 = arith.muli %c5_i32, %c8_i32_39 : i32
    %cst_40 = arith.constant dense<0.000000e+00> : vector<8x128xf32>
    %126 = tpu.matmul %122, %13, %cst_40 {dimension_numbers = #tpu.dot_dimension_numbers<[1], [0], [0], [1], [0, 0, 1, 1], [], []>} : vector<8x32xf32>, vector<32x128xf32>, vector<8x128xf32> -> vector<8x128xf32>
    %127 = arith.index_cast %125 : i32 to index
    %c0_41 = arith.constant 0 : index
    %128 = vector.load %arg9[%127, %c0_41] : memref<64x128xf32, #tpu.memory_space<vmem>>, vector<8x128xf32>
    %129 = arith.addf %126, %128 : vector<8x128xf32>
    %130 = arith.negf %129 : vector<8x128xf32>
    %131 = math.exp %130 : vector<8x128xf32>
    %cst_42 = arith.constant 1.000000e+00 : f32
    %132 = vector.broadcast %cst_42 : f32 to vector<8x128xf32>
    %133 = arith.addf %132, %131 : vector<8x128xf32>
    %134 = arith.divf %132, %133 : vector<8x128xf32>
    %135 = math.tanh %129 : vector<8x128xf32>
    %136 = vector.extract_strided_slice %134 {offsets = [0, 0], sizes = [8, 32], strides = [1, 1]} : vector<8x128xf32> to vector<8x32xf32>
    %137 = vector.extract_strided_slice %134 {offsets = [0, 32], sizes = [8, 32], strides = [1, 1]} : vector<8x128xf32> to vector<8x32xf32>
    %138 = vector.extract_strided_slice %135 {offsets = [0, 64], sizes = [8, 32], strides = [1, 1]} : vector<8x128xf32> to vector<8x32xf32>
    %139 = vector.extract_strided_slice %134 {offsets = [0, 96], sizes = [8, 32], strides = [1, 1]} : vector<8x128xf32> to vector<8x32xf32>
    %140 = arith.mulf %137, %120 : vector<8x32xf32>
    %141 = arith.mulf %136, %138 : vector<8x32xf32>
    %142 = arith.addf %140, %141 : vector<8x32xf32>
    %143 = math.tanh %142 : vector<8x32xf32>
    %144 = arith.mulf %139, %143 : vector<8x32xf32>
    %145 = arith.index_cast %125 : i32 to index
    %c0_43 = arith.constant 0 : index
    %146 = vector.load %arg8[%145, %c0_43] : memref<64x32xf32, #tpu.memory_space<vmem>>, vector<8x32xf32>
    tpu.vector_store %arg8[%145, %c0_43], %144 {strides = array<i32>} : memref<64x32xf32, #tpu.memory_space<vmem>>, vector<8x32xf32>,
    %c6_i32 = arith.constant 6 : i32
    %c8_i32_44 = arith.constant 8 : i32
    %147 = arith.muli %c6_i32, %c8_i32_44 : i32
    %cst_45 = arith.constant dense<0.000000e+00> : vector<8x128xf32>
    %148 = tpu.matmul %144, %13, %cst_45 {dimension_numbers = #tpu.dot_dimension_numbers<[1], [0], [0], [1], [0, 0, 1, 1], [], []>} : vector<8x32xf32>, vector<32x128xf32>, vector<8x128xf32> -> vector<8x128xf32>
    %149 = arith.index_cast %147 : i32 to index
    %c0_46 = arith.constant 0 : index
    %150 = vector.load %arg9[%149, %c0_46] : memref<64x128xf32, #tpu.memory_space<vmem>>, vector<8x128xf32>
    %151 = arith.addf %148, %150 : vector<8x128xf32>
    %152 = arith.negf %151 : vector<8x128xf32>
    %153 = math.exp %152 : vector<8x128xf32>
    %cst_47 = arith.constant 1.000000e+00 : f32
    %154 = vector.broadcast %cst_47 : f32 to vector<8x128xf32>
    %155 = arith.addf %154, %153 : vector<8x128xf32>
    %156 = arith.divf %154, %155 : vector<8x128xf32>
    %157 = math.tanh %151 : vector<8x128xf32>
    %158 = vector.extract_strided_slice %156 {offsets = [0, 0], sizes = [8, 32], strides = [1, 1]} : vector<8x128xf32> to vector<8x32xf32>
    %159 = vector.extract_strided_slice %156 {offsets = [0, 32], sizes = [8, 32], strides = [1, 1]} : vector<8x128xf32> to vector<8x32xf32>
    %160 = vector.extract_strided_slice %157 {offsets = [0, 64], sizes = [8, 32], strides = [1, 1]} : vector<8x128xf32> to vector<8x32xf32>
    %161 = vector.extract_strided_slice %156 {offsets = [0, 96], sizes = [8, 32], strides = [1, 1]} : vector<8x128xf32> to vector<8x32xf32>
    %162 = arith.mulf %159, %142 : vector<8x32xf32>
    %163 = arith.mulf %158, %160 : vector<8x32xf32>
    %164 = arith.addf %162, %163 : vector<8x32xf32>
    %165 = math.tanh %164 : vector<8x32xf32>
    %166 = arith.mulf %161, %165 : vector<8x32xf32>
    %167 = arith.index_cast %147 : i32 to index
    %c0_48 = arith.constant 0 : index
    %168 = vector.load %arg8[%167, %c0_48] : memref<64x32xf32, #tpu.memory_space<vmem>>, vector<8x32xf32>
    tpu.vector_store %arg8[%167, %c0_48], %166 {strides = array<i32>} : memref<64x32xf32, #tpu.memory_space<vmem>>, vector<8x32xf32>,
    %c7_i32 = arith.constant 7 : i32
    %c8_i32_49 = arith.constant 8 : i32
    %169 = arith.muli %c7_i32, %c8_i32_49 : i32
    %cst_50 = arith.constant dense<0.000000e+00> : vector<8x128xf32>
    %170 = tpu.matmul %166, %13, %cst_50 {dimension_numbers = #tpu.dot_dimension_numbers<[1], [0], [0], [1], [0, 0, 1, 1], [], []>} : vector<8x32xf32>, vector<32x128xf32>, vector<8x128xf32> -> vector<8x128xf32>
    %171 = arith.index_cast %169 : i32 to index
    %c0_51 = arith.constant 0 : index
    %172 = vector.load %arg9[%171, %c0_51] : memref<64x128xf32, #tpu.memory_space<vmem>>, vector<8x128xf32>
    %173 = arith.addf %170, %172 : vector<8x128xf32>
    %174 = arith.negf %173 : vector<8x128xf32>
    %175 = math.exp %174 : vector<8x128xf32>
    %cst_52 = arith.constant 1.000000e+00 : f32
    %176 = vector.broadcast %cst_52 : f32 to vector<8x128xf32>
    %177 = arith.addf %176, %175 : vector<8x128xf32>
    %178 = arith.divf %176, %177 : vector<8x128xf32>
    %179 = math.tanh %173 : vector<8x128xf32>
    %180 = vector.extract_strided_slice %178 {offsets = [0, 0], sizes = [8, 32], strides = [1, 1]} : vector<8x128xf32> to vector<8x32xf32>
    %181 = vector.extract_strided_slice %178 {offsets = [0, 32], sizes = [8, 32], strides = [1, 1]} : vector<8x128xf32> to vector<8x32xf32>
    %182 = vector.extract_strided_slice %179 {offsets = [0, 64], sizes = [8, 32], strides = [1, 1]} : vector<8x128xf32> to vector<8x32xf32>
    %183 = vector.extract_strided_slice %178 {offsets = [0, 96], sizes = [8, 32], strides = [1, 1]} : vector<8x128xf32> to vector<8x32xf32>
    %184 = arith.mulf %181, %164 : vector<8x32xf32>
    %185 = arith.mulf %180, %182 : vector<8x32xf32>
    %186 = arith.addf %184, %185 : vector<8x32xf32>
    %187 = math.tanh %186 : vector<8x32xf32>
    %188 = arith.mulf %183, %187 : vector<8x32xf32>
    %189 = arith.index_cast %169 : i32 to index
    %c0_53 = arith.constant 0 : index
    %190 = vector.load %arg8[%189, %c0_53] : memref<64x32xf32, #tpu.memory_space<vmem>>, vector<8x32xf32>
    tpu.vector_store %arg8[%189, %c0_53], %188 {strides = array<i32>} : memref<64x32xf32, #tpu.memory_space<vmem>>, vector<8x32xf32>,
    %c8_i32_54 = arith.constant 8 : i32
    %c1_i32_55 = arith.constant 1 : i32
    %191 = arith.cmpi eq, %arg0, %c1_i32_55 : i32
    %192 = arith.extui %191 : i1 to i32
    %c0_i32_56 = arith.constant 0 : i32
    %193 = arith.cmpi ne, %192, %c0_i32_56 : i32
    scf.if %193 {
      %c0_57 = arith.constant 0 : index
      %c0_58 = arith.constant 0 : index
      %194 = vector.load %arg5[%c0_57, %c0_58] : memref<1x32xf32, #tpu.memory_space<vmem>>, vector<1x32xf32>
      %195 = vector.broadcast %194 : vector<1x32xf32> to vector<8x32xf32>
      %196 = arith.mulf %188, %195 : vector<8x32xf32>
      %cst_59 = arith.constant dense<0.000000e+00> : vector<8xf32>
      %197 = vector.multi_reduction <add>, %196, %cst_59 [1] : vector<8x32xf32> to vector<8xf32>
      %198 = vector.shape_cast %197 : vector<8xf32> to vector<8x1xf32>
      %c0_60 = arith.constant 0 : index
      %c0_61 = arith.constant 0 : index
      %199 = vector.load %arg6[%c0_60, %c0_61] : memref<1x1xf32, #tpu.memory_space<vmem>>, vector<1x1xf32>
      %200 = vector.broadcast %199 : vector<1x1xf32> to vector<8x1xf32>
      %201 = arith.addf %198, %200 : vector<8x1xf32>
      %cst_62 = arith.constant 0.000000e+00 : f32
      %202 = vector.broadcast %cst_62 : f32 to vector<8x1xf32>
      %203 = arith.cmpf oge, %201, %202 : vector<8x1xf32>
      %cst_63 = arith.constant 0.00999999977 : f32
      %204 = vector.broadcast %cst_63 : f32 to vector<8x1xf32>
      %205 = arith.mulf %204, %201 : vector<8x1xf32>
      %206 = arith.select %203, %201, %205 : vector<8x1xi1>, vector<8x1xf32>
      %207 = vector.shape_cast %206 : vector<8x1xf32> to vector<8x1xf32>
      %208 = vector.broadcast %207 : vector<8x1xf32> to vector<8x128xf32>
      %c0_64 = arith.constant 0 : index
      %c0_65 = arith.constant 0 : index
      %209 = vector.load %arg7[%c0_64, %c0_65] : memref<8x128xf32, #tpu.memory_space<vmem>>, vector<8x128xf32>
      tpu.vector_store %arg7[%c0_64, %c0_65], %208 {strides = array<i32>} : memref<8x128xf32, #tpu.memory_space<vmem>>, vector<8x128xf32>,
    } else {
    }
    return
  }
  func.func @transform_0(%arg0: i32) -> (i32, i32) {
    %c0_i32 = arith.constant 0 : i32
    %c0_i32_0 = arith.constant 0 : i32
    %c0_i32_1 = arith.constant 0 : i32
    return %c0_i32, %c0_i32_0 : i32, i32
  }
  func.func @transform_1(%arg0: i32) -> (i32, i32, i32) {
    %c0_i32 = arith.constant 0 : i32
    %c0_i32_0 = arith.constant 0 : i32
    %c0_i32_1 = arith.constant 0 : i32
    return %arg0, %c0_i32, %c0_i32_0 : i32, i32, i32
  }
  func.func @transform_2(%arg0: i32) -> (i32, i32, i32) {
    %c0_i32 = arith.constant 0 : i32
    %c0_i32_0 = arith.constant 0 : i32
    %c0_i32_1 = arith.constant 0 : i32
    return %arg0, %c0_i32, %c0_i32_0 : i32, i32, i32
  }
  func.func @transform_3(%arg0: i32) -> (i32, i32, i32) {
    %c0_i32 = arith.constant 0 : i32
    %c0_i32_0 = arith.constant 0 : i32
    %c0_i32_1 = arith.constant 0 : i32
    return %arg0, %c0_i32, %c0_i32_0 : i32, i32, i32
  }
  func.func @transform_4(%arg0: i32) -> (i32, i32) {
    %c0_i32 = arith.constant 0 : i32
    %c0_i32_0 = arith.constant 0 : i32
    %c0_i32_1 = arith.constant 0 : i32
    return %c0_i32, %c0_i32_0 : i32, i32
  }
  func.func @transform_5(%arg0: i32) -> (i32, i32) {
    %c0_i32 = arith.constant 0 : i32
    %c0_i32_0 = arith.constant 0 : i32
    %c0_i32_1 = arith.constant 0 : i32
    return %c0_i32, %c0_i32_0 : i32, i32
  }
  func.func @transform_6(%arg0: i32) -> (i32, i32) {
    %c0_i32 = arith.constant 0 : i32
    %c0_i32_0 = arith.constant 0 : i32
    %c0_i32_1 = arith.constant 0 : i32
    return %c0_i32, %c0_i32_0 : i32, i32
  }
}

</mosaic_0001>

<llo_original>
// kernel: tpu_custom_call.1
$region0: #{tpu_custom_call.1}
  #allocation0 [shape = 'u32[]', space=smem, size = 0x4, offset = 0x4, fixed_abs, tag = 'smem constant byte address 0x4 - core index']
  #allocation1 [shape = 'u32[144,128]{1,0:T(1,128)}', space=vmem, size = 0x12000, scoped, tag = 'internal scratch']
  #allocation2 [shape = 'f32[64,32]{1,0:T(8,128)}', space=vmem, size = 0x8000, scoped, tag = 'scratch operand']
  #allocation3 [shape = 'f32[64,128]{1,0:T(8,128)}', space=vmem, size = 0x8000, scoped, tag = 'scratch operand']
  #allocation4 [shape = 'f32[1,1]{1,0:T(1,128)S(1)}', space=vmem, size = 0x200, scoped, tag = 'scoped memory for tpu_custom_call.1']
  %s0 = inlined_call_operand.vmem [shape: f32[64,32], index: 0, kind: input, shape index: {}]
  %s1 = inlined_call_operand.vmem [shape: f32[2,32,128], index: 1, kind: input, shape index: {}]
  %s2 = inlined_call_operand.hbm [shape: f32[2,32,128], index: 2, kind: input, shape index: {}]
  %s3 = inlined_call_operand.vmem [shape: f32[2,1,128], index: 3, kind: input, shape index: {}]
  %s4 = inlined_call_operand.vmem [shape: f32[1,32], index: 4, kind: input, shape index: {}]
  %s5 = inlined_call_operand.<no memory space> [shape: f32[1,1], index: 5, kind: input, shape index: {}]
  %s6 = inlined_call_operand.hbm [shape: f32[8,128], index: 6, kind: output, shape index: {}]
  %s7 = sld [smem:[#allocation0]]
  $region69: #{tpu_custom_call.1} parent=0
    _
  %s9 = ssub.s32 1, %s7
  %s10 = scalar_select 0, %s9, %s7
  %v11 = vstv %s5
  %12 = vst [vmem:[#allocation4] sm:$0x1] %v11
  $region1: #{tpu_custom_call.1} parent=0
    #allocation5 [shape = 'u8[32768]{0}', space=vmem, size = 0x8000, scoped, tag = 'input window, operand 2']
    #allocation6 [shape = 's32[2]{0}', space=sflag, size = 0x8, scoped, tag = 'scoped memory for tpu_custom_call.1']
    #allocation7 [shape = 's32[2]{0}', space=sflag, size = 0x8, scoped, tag = 'scoped memory for tpu_custom_call.1']
    #allocation8 [shape = 'u8[4096]{0}', space=vmem, size = 0x1000, scoped, tag = 'output window, operand 0, single buffered']
    %13 = vsyncpa [#allocation6], 0
    %s14 = scalar_lea.sflag [#allocation6], 1
    %15 = vsyncpa %s14, 0
    %16 = vsyncpa [#allocation7], 0
    loop: start=0, step=1, limit=4
    $region2: #{tpu_custom_call.1} parent=1 // loop_pre_header
      _
    $region3: #{tpu_custom_call.1} parent=1 // loop_header
      %s18 = sphi 0, %s22
      %p19 = scmp.ge.s32.totalorder %s18, 4
      %s26 = sphi 0, %s26
      %s28 = sphi 0, %s26
      %s29 = sphi 0, %s28
      %s43 = sphi 0, %s29
      %s49 = sphi 0, %s51
      %s52 = sphi 0, %s49
      %s53 = sphi 0, %s52
      %s69 = sphi 0, %s53
      %s75 = sphi 0, %s77
      %s78 = sphi 0, %s75
      %s79 = sphi 0, %s78
      %s95 = sphi 0, %s79
      %s101 = sphi 0, %s103
      %s104 = sphi 0, %s101
      %s105 = sphi 0, %s104
      %s121 = sphi 0, %s105
      %s125 = sphi 0, %s125
      %s127 = sphi 0, %s125
      %s128 = sphi 0, %s127
      %s142 = sphi 0, %s128
      %s146 = sphi 0, %s146
      %s148 = sphi 0, %s146
      %s149 = sphi 0, %s148
      %s163 = sphi 0, %s149
      %s167 = sphi 0, %s167
      %s169 = sphi 0, %s167
      %s170 = sphi 0, %s169
      %s184 = sphi 0, %s170
    $region4: #{tpu_custom_call.1} parent=1 // loop_header_branch
      %21 = sbr.rel (%p19) target = $region8
    $region5: #{tpu_custom_call.1} parent=1 // loop_body
      %s23 = ssub.s32 %s18, 1
      %s24 = ssub.s32 %s18, 2
      %s25 = sadd.s32 %s18, 1
      %s27 = sadd.s32 %s26, 1
      %p30 = scmp.eq.s32.totalorder %s18, 1
      %p31 = scmp.ne.s32.totalorder %s26, %s28
      %p32 = scmp.eq.s32.totalorder %s18, 0
      %p33 = por %p31, %p32
      %p34 = scmp.ne.s32.totalorder %s26, %s28
      %p35 = scmp.eq.s32.totalorder %s23, 1
      %p36 = por %p34, %p35
      %p37 = scmp.ne.s32.totalorder %s28, %s29
      %p38 = scmp.eq.s32.totalorder %s23, 0
      %p39 = por %p37, %p38
      %p40 = scmp.ne.s32.totalorder %s28, %s29
      %p41 = scmp.eq.s32.totalorder %s24, 1
      %p42 = por %p40, %p41
      %p44 = scmp.ne.s32.totalorder %s29, %s43
      %p45 = scmp.eq.s32.totalorder %s24, 0
      %p46 = por %p44, %p45
      %s47 = ssub.s32 %s18, %s25
      %p48 = scmp.eq.s32.totalorder %s47, 0
      %s50 = sadd.s32 %s49, 1
      %s51 = scalar_select %p48, %s49, %s50
      %p54 = pneg %p48
      %p55 = scmp.eq.s32.totalorder %s18, 1
      %p56 = por %p54, %p55
      %p57 = scmp.ne.s32.totalorder %s49, %s52
      %p58 = scmp.eq.s32.totalorder %s18, 0
      %p59 = por %p57, %p58
      %p60 = scmp.ne.s32.totalorder %s49, %s52
      %p61 = scmp.eq.s32.totalorder %s23, 1
      %p62 = por %p60, %p61
      %p63 = scmp.ne.s32.totalorder %s52, %s53
      %p64 = scmp.eq.s32.totalorder %s23, 0
      %p65 = por %p63, %p64
      %p66 = scmp.ne.s32.totalorder %s52, %s53
      %p67 = scmp.eq.s32.totalorder %s24, 1
      %p68 = por %p66, %p67
      %p70 = scmp.ne.s32.totalorder %s53, %s69
      %p71 = scmp.eq.s32.totalorder %s24, 0
      %p72 = por %p70, %p71
      %s73 = ssub.s32 %s18, %s25
      %p74 = scmp.eq.s32.totalorder %s73, 0
      %s76 = sadd.s32 %s75, 1
      %s77 = scalar_select %p74, %s75, %s76
      %p80 = pneg %p74
      %p81 = scmp.eq.s32.totalorder %s18, 1
      %p82 = por %p80, %p81
      %p83 = scmp.ne.s32.totalorder %s75, %s78
      %p84 = scmp.eq.s32.totalorder %s18, 0
      %p85 = por %p83, %p84
      %p86 = scmp.ne.s32.totalorder %s75, %s78
      %p87 = scmp.eq.s32.totalorder %s23, 1
      %p88 = por %p86, %p87
      %p89 = scmp.ne.s32.totalorder %s78, %s79
      %p90 = scmp.eq.s32.totalorder %s23, 0
      %p91 = por %p89, %p90
      %p92 = scmp.ne.s32.totalorder %s78, %s79
      %p93 = scmp.eq.s32.totalorder %s24, 1
      %p94 = por %p92, %p93
      %p96 = scmp.ne.s32.totalorder %s79, %s95
      %p97 = scmp.eq.s32.totalorder %s24, 0
      %p98 = por %p96, %p97
      %s99 = ssub.s32 %s18, %s25
      %p100 = scmp.eq.s32.totalorder %s99, 0
      %s102 = sadd.s32 %s101, 1
      %s103 = scalar_select %p100, %s101, %s102
      %p106 = pneg %p100
      %p107 = scmp.eq.s32.totalorder %s18, 1
      %p108 = por %p106, %p107
      %p109 = scmp.ne.s32.totalorder %s101, %s104
      %p110 = scmp.eq.s32.totalorder %s18, 0
      %p111 = por %p109, %p110
      %p112 = scmp.ne.s32.totalorder %s101, %s104
      %p113 = scmp.eq.s32.totalorder %s23, 1
      %p114 = por %p112, %p113
      %p115 = scmp.ne.s32.totalorder %s104, %s105
      %p116 = scmp.eq.s32.totalorder %s23, 0
      %p117 = por %p115, %p116
      %p118 = scmp.ne.s32.totalorder %s104, %s105
      %p119 = scmp.eq.s32.totalorder %s24, 1
      %p120 = por %p118, %p119
      %p122 = scmp.ne.s32.totalorder %s105, %s121
      %p123 = scmp.eq.s32.totalorder %s24, 0
      %p124 = por %p122, %p123
      %s126 = sadd.s32 %s125, 1
      %p129 = scmp.eq.s32.totalorder %s18, 1
      %p130 = scmp.ne.s32.totalorder %s125, %s127
      %p131 = scmp.eq.s32.totalorder %s18, 0
      %p132 = por %p130, %p131
      %p133 = scmp.ne.s32.totalorder %s125, %s127
      %p134 = scmp.eq.s32.totalorder %s23, 1
      %p135 = por %p133, %p134
      %p136 = scmp.ne.s32.totalorder %s127, %s128
      %p137 = scmp.eq.s32.totalorder %s23, 0
      %p138 = por %p136, %p137
      %p139 = scmp.ne.s32.totalorder %s127, %s128
      %p140 = scmp.eq.s32.totalorder %s24, 1
      %p141 = por %p139, %p140
      %p143 = scmp.ne.s32.totalorder %s128, %s142
      %p144 = scmp.eq.s32.totalorder %s24, 0
      %p145 = por %p143, %p144
      %s147 = sadd.s32 %s146, 1
      %p150 = scmp.eq.s32.totalorder %s18, 1
      %p151 = scmp.ne.s32.totalorder %s146, %s148
      %p152 = scmp.eq.s32.totalorder %s18, 0
      %p153 = por %p151, %p152
      %p154 = scmp.ne.s32.totalorder %s146, %s148
      %p155 = scmp.eq.s32.totalorder %s23, 1
      %p156 = por %p154, %p155
      %p157 = scmp.ne.s32.totalorder %s148, %s149
      %p158 = scmp.eq.s32.totalorder %s23, 0
      %p159 = por %p157, %p158
      %p160 = scmp.ne.s32.totalorder %s148, %s149
      %p161 = scmp.eq.s32.totalorder %s24, 1
      %p162 = por %p160, %p161
      %p164 = scmp.ne.s32.totalorder %s149, %s163
      %p165 = scmp.eq.s32.totalorder %s24, 0
      %p166 = por %p164, %p165
      %s168 = sadd.s32 %s167, 1
      %p171 = scmp.eq.s32.totalorder %s18, 1
      %p172 = scmp.ne.s32.totalorder %s167, %s169
      %p173 = scmp.eq.s32.totalorder %s18, 0
      %p174 = por %p172, %p173
      %p175 = scmp.ne.s32.totalorder %s167, %s169
      %p176 = scmp.eq.s32.totalorder %s23, 1
      %p177 = por %p175, %p176
      %p178 = scmp.ne.s32.totalorder %s169, %s170
      %p179 = scmp.eq.s32.totalorder %s23, 0
      %p180 = por %p178, %p179
      %p181 = scmp.ne.s32.totalorder %s169, %s170
      %p182 = scmp.eq.s32.totalorder %s24, 1
      %p183 = por %p181, %p182
      %p185 = scmp.ne.s32.totalorder %s170, %s184
      %p186 = scmp.eq.s32.totalorder %s24, 0
      %p187 = por %p185, %p186
      %p188 = scmp.le.s32.totalorder 1, %s18
      %p189 = scmp.lt.s32.totalorder %s18, 3
      %p190 = pnand %p188, %p189
      %p191 = pneg %p190
      // Predicated region
      $region9: #{tpu_custom_call.1} parent=5 // pred_check
        _
      $region10: #{tpu_custom_call.1} parent=5 // pred_check_branch
        %193 = sbr.rel (%p190) target = $region12
      $region11: #{tpu_custom_call.1} parent=5 // pred_region
        %s194 = ssub.s32 %s18, 1
        // Predicated region
        $region13: #{tpu_custom_call.1} parent=11 // pred_check
          %p195 = pneg %p39
        $region14: #{tpu_custom_call.1} parent=11 // pred_check_branch
          %197 = sbr.rel (%p195) target = $region16
        $region15: #{tpu_custom_call.1} parent=11 // pred_region
          _
        $region16: #{tpu_custom_call.1} parent=11 // pred_fallthru
          _
        // Predicated region
        $region17: #{tpu_custom_call.1} parent=11 // pred_check
          %p198 = pneg %p138
        $region18: #{tpu_custom_call.1} parent=11 // pred_check_branch
          %200 = sbr.rel (%p198) target = $region20
        $region19: #{tpu_custom_call.1} parent=11 // pred_region
          _
        $region20: #{tpu_custom_call.1} parent=11 // pred_fallthru
          _
        // Predicated region
        $region21: #{tpu_custom_call.1} parent=11 // pred_check
          %p201 = pneg %p159
        $region22: #{tpu_custom_call.1} parent=11 // pred_check_branch
          %203 = sbr.rel (%p201) target = $region24
        $region23: #{tpu_custom_call.1} parent=11 // pred_region
          _
        $region24: #{tpu_custom_call.1} parent=11 // pred_fallthru
          _
      $region12: #{tpu_custom_call.1} parent=5 // pred_fallthru
        _
      %p204 = scmp.lt.s32.totalorder %s18, 2
      // Predicated region
      $region25: #{tpu_custom_call.1} parent=5 // pred_check
        %p205 = pneg %p204
      $region26: #{tpu_custom_call.1} parent=5 // pred_check_branch
        %207 = sbr.rel (%p205) target = $region28
      $region27: #{tpu_custom_call.1} parent=5 // pred_region
        // Predicated region
        $region29: #{tpu_custom_call.1} parent=27 // pred_check
          %p208 = pneg %p59
        $region30: #{tpu_custom_call.1} parent=27 // pred_check_branch
          %210 = sbr.rel (%p208) target = $region32
        $region31: #{tpu_custom_call.1} parent=27 // pred_region
          %p211 = scmp.lt.s32.totalorder %s18, 1
          %s212 = scalar_select %p211, %s18, 1
          %s213 = smul.addr %s212, 4
          %s214 = smul.addr %s213, 8
          %s215 = scalar_lea.vmem %s1, %s214
        $region32: #{tpu_custom_call.1} parent=27 // pred_fallthru
          _
        // Predicated region
        $region33: #{tpu_custom_call.1} parent=27 // pred_check
          %p216 = pneg %p85
        $region34: #{tpu_custom_call.1} parent=27 // pred_check_branch
          %218 = sbr.rel (%p216) target = $region36
        $region35: #{tpu_custom_call.1} parent=27 // pred_region
          %s219 = sand.u32 %s75, 1
          %s220 = scalar_lea.sflag [#allocation6], %s219
          %s221 = sand.u32 %s75, 1
          %s222 = smul.addr %s221, 32
          %s223 = scalar_lea.vmem [#allocation5], %s222
          %s225 = ssub.s32 512, 512
          %226 = vsyncadd %s220, %s225
          %s227 = smul.addr %s18, 4
          %s228 = smul.addr %s227, 128
          %s229 = scalar_lea.hbm %s2, %s228
          %s230 = sshll.u32 %s223, 4
          %s231 = int_to_ptr.vmem [resolvable:$true] %s230
          %236 = dma.hbm_to_vmem [thread:$0]  %s229, 512, %s231, %s220, 128, 128, 8
        $region36: #{tpu_custom_call.1} parent=27 // pred_fallthru
          _
        // Predicated region
        $region37: #{tpu_custom_call.1} parent=27 // pred_check
          %p237 = pneg %p111
        $region38: #{tpu_custom_call.1} parent=27 // pred_check_branch
          %239 = sbr.rel (%p237) target = $region40
        $region39: #{tpu_custom_call.1} parent=27 // pred_region
          %p240 = scmp.lt.s32.totalorder %s18, 1
          %s241 = scalar_select %p240, %s18, 1
          %s242 = scalar_lea.vmem %s3, %s241
        $region40: #{tpu_custom_call.1} parent=27 // pred_fallthru
          _
      $region28: #{tpu_custom_call.1} parent=5 // pred_fallthru
        _
      %p243 = scmp.le.s32.totalorder 1, %s18
      %p244 = scmp.lt.s32.totalorder %s18, 3
      %p245 = pnand %p243, %p244
      %p246 = pneg %p245
      // Predicated region
      $region41: #{tpu_custom_call.1} parent=5 // pred_check
        _
      $region42: #{tpu_custom_call.1} parent=5 // pred_check_branch
        %248 = sbr.rel (%p245) target = $region44
      $region43: #{tpu_custom_call.1} parent=5 // pred_region
        %s249 = ssub.s32 %s18, 1
        %s250 = sand.u32 %s78, 1
        %s251 = scalar_lea.sflag [#allocation6], %s250
        %s252 = sand.u32 %s78, 1
        %s253 = smul.addr %s252, 32
        %s254 = scalar_lea.vmem [#allocation5], %s253
        // Predicated region
        $region45: #{tpu_custom_call.1} parent=43 // pred_check
          %p255 = pneg %p91
        $region46: #{tpu_custom_call.1} parent=43 // pred_check_branch
          %257 = sbr.rel (%p255) target = $region48
        $region47: #{tpu_custom_call.1} parent=43 // pred_region
          %258 = dma.done %s251, 512
        $region48: #{tpu_custom_call.1} parent=43 // pred_fallthru
          _
        %p259 = pneg %p39
        %p260 = pneg %p36
        %p261 = scmp.lt.s32.totalorder %s23, 1
        %s262 = scalar_select %p261, %s23, 1
        %s263 = smul.addr %s262, 4
        %s264 = smul.addr %s263, 8
        %s265 = scalar_lea.vmem %s1, %s264
        %p266 = pneg %p65
        %p267 = pneg %p62
        %s268 = sand.u32 %s78, 1
        %s269 = scalar_lea.sflag [#allocation6], %s268
        %s270 = sand.u32 %s78, 1
        %s271 = smul.addr %s270, 32
        %s272 = scalar_lea.vmem [#allocation5], %s271
        %p273 = pneg %p91
        %p274 = pneg %p88
        %p275 = scmp.lt.s32.totalorder %s23, 1
        %s276 = scalar_select %p275, %s23, 1
        %s277 = scalar_lea.vmem %s3, %s276
        %p278 = pneg %p117
        %p279 = pneg %p114
        %p280 = pneg %p138
        %p281 = pneg %p135
        %p282 = pneg %p159
        %p283 = pneg %p156
        %p284 = pneg %p180
        %p285 = pneg %p177
        %p286 = scmp.lt.s32.totalorder %s23, 1
        %s287 = scalar_select %p286, %s23, 1
        %s288 = smul.addr %s287, 4
        %s289 = smul.addr %s288, 8
        %s290 = scalar_lea.vmem %s1, %s289
        %p291 = scmp.lt.s32.totalorder %s23, 1
        %s292 = scalar_select %p291, %s23, 1
        %s293 = scalar_lea.vmem %s3, %s292
        %p294 = scmp.eq.s32.totalorder %s23, 0
        // Predicated region
        $region49: #{tpu_custom_call.1} parent=43 // pred_check
          %p295 = pneg %p294
        $region50: #{tpu_custom_call.1} parent=43 // pred_check_branch
          %297 = sbr.rel (%p295) target = $region52
        $region51: #{tpu_custom_call.1} parent=43 // pred_region
          %v298 = vld [vmem:[%s0] sm:$0xff]
          %v299 = vld [vmem:[%s0 + $0x8] sm:$0xff]
          %v300 = vld [vmem:[%s0 + $0x10] sm:$0xff]
          %v301 = vld [vmem:[%s0 + $0x18] sm:$0xff]
          %v302 = vld [vmem:[%s0 + $0x20] sm:$0xff]
          %v303 = vld [vmem:[%s0 + $0x28] sm:$0xff]
          %v304 = vld [vmem:[%s0 + $0x30] sm:$0xff]
          %v305 = vld [vmem:[%s0 + $0x38] sm:$0xff]
          %vm306 = vcmask 261120
          %307 = vst.msk [vmem:[#allocation2] sm:$0xff] %vm306, %v298
          %308 = vst.msk [vmem:[#allocation2 + $0x8] sm:$0xff] %vm306, %v299
          %309 = vst.msk [vmem:[#allocation2 + $0x10] sm:$0xff] %vm306, %v300
          %310 = vst.msk [vmem:[#allocation2 + $0x18] sm:$0xff] %vm306, %v301
          %311 = vst.msk [vmem:[#allocation2 + $0x20] sm:$0xff] %vm306, %v302
          %312 = vst.msk [vmem:[#allocation2 + $0x28] sm:$0xff] %vm306, %v303
          %313 = vst.msk [vmem:[#allocation2 + $0x30] sm:$0xff] %vm306, %v304
          %314 = vst.msk [vmem:[#allocation2 + $0x38] sm:$0xff] %vm306, %v305
        $region52: #{tpu_custom_call.1} parent=43 // pred_fallthru
          _
        %v315 = vld [vmem:[#allocation2] sm:$0xff]
        %v316 = vld [vmem:[#allocation2 + $0x8] sm:$0xff]
        %v317 = vld [vmem:[#allocation2 + $0x10] sm:$0xff]
        %v318 = vld [vmem:[#allocation2 + $0x18] sm:$0xff]
        %v319 = vld [vmem:[#allocation2 + $0x20] sm:$0xff]
        %v320 = vld [vmem:[#allocation2 + $0x28] sm:$0xff]
        %v321 = vld [vmem:[#allocation2 + $0x30] sm:$0xff]
        %v322 = vld [vmem:[#allocation2 + $0x38] sm:$0xff]
        %v323 = vld [vmem:[%s290] sm:$0xff]
        %v324 = vld [vmem:[%s290 + $0x8] sm:$0xff]
        %v325 = vld [vmem:[%s290 + $0x10] sm:$0xff]
        %v326 = vld [vmem:[%s290 + $0x18] sm:$0xff]
        %v327 = vld [vmem:[%s293] sm:$0x1]
        %v329 = vlaneseq
        %v330 = vshrl.u32 %v329, 7
        %v331 = vsub.s32 0, %v330
        %v332 = vrot.slane %v327, %v331
        %vm334 = vcmask 261120
        %v336 = vsel %vm334, %v315, 0
        %v339 = vsel %vm334, %v316, 0
        %v342 = vsel %vm334, %v317, 0
        %v345 = vsel %vm334, %v318, 0
        %v348 = vsel %vm334, %v319, 0
        %v351 = vsel %vm334, %v320, 0
        %v354 = vsel %vm334, %v321, 0
        %v357 = vsel %vm334, %v322, 0
        %359 = vmatprep.subr.mxu0 0.0
        %360 = vmatpush1.msra.mxu0 0.0
        %361 = vmatprep.subr.mxu0 0.0
        %362 = vmatpush1.msra.mxu0 0.0
        %363 = vmatprep.subr.mxu0 0.0
        %364 = vmatpush1.msra.mxu0 0.0
        %365 = vmatprep.subr.mxu0 0.0
        %366 = vmatpush1.msra.mxu0 0.0
        %367 = vmatprep.subr.mxu0 0.0
        %368 = vmatpush1.msra.mxu0 0.0
        %369 = vmatprep.subr.mxu0 0.0
        %370 = vmatpush1.msra.mxu0 0.0
        %371 = vmatprep.subr.mxu0 0.0
        %372 = vmatpush1.msra.mxu0 0.0
        %373 = vmatprep.subr.mxu0 0.0
        %374 = vmatpush1.msra.mxu0 0.0
        %375 = vmatprep.subr.mxu0 0.0
        %376 = vmatpush1.msra.mxu0 0.0
        %377 = vmatprep.subr.mxu0 0.0
        %378 = vmatpush1.msra.mxu0 0.0
        %379 = vmatprep.subr.mxu0 0.0
        %380 = vmatpush1.msra.mxu0 0.0
        %381 = vmatprep.subr.mxu0 0.0
        %382 = vmatpush1.msra.mxu0 0.0
        %383 = vmatprep.subr.mxu0 0.0
        %384 = vmatpush1.msra.mxu0 %v326
        %385 = vmatprep.subr.mxu0 0.0
        %386 = vmatpush1.msra.mxu0 %v325
        %387 = vmatprep.subr.mxu0 0.0
        %388 = vmatpush1.msra.mxu0 %v324
        %389 = vmatprep.subr.mxu0 0.0
        %390 = vmatpush1.msra.mxu0 %v323
        %391 = vmatprep.subr.mxu0 0.0
        %392 = vmatpush2.msra.mxu0 0.0
        %393 = vmatprep.subr.mxu0 0.0
        %394 = vmatpush2.msra.mxu0 0.0
        %395 = vmatprep.subr.mxu0 0.0
        %396 = vmatpush2.msra.mxu0 0.0
        %397 = vmatprep.subr.mxu0 0.0
        %398 = vmatpush2.msra.mxu0 0.0
        %399 = vmatprep.subr.mxu0 0.0
        %400 = vmatpush2.msra.mxu0 0.0
        %401 = vmatprep.subr.mxu0 0.0
        %402 = vmatpush2.msra.mxu0 0.0
        %403 = vmatprep.subr.mxu0 0.0
        %404 = vmatpush2.msra.mxu0 0.0
        %405 = vmatprep.subr.mxu0 0.0
        %406 = vmatpush2.msra.mxu0 0.0
        %407 = vmatprep.subr.mxu0 0.0
        %408 = vmatpush2.msra.mxu0 0.0
        %409 = vmatprep.subr.mxu0 0.0
        %410 = vmatpush2.msra.mxu0 0.0
        %411 = vmatprep.subr.mxu0 0.0
        %412 = vmatpush2.msra.mxu0 0.0
        %413 = vmatprep.subr.mxu0 0.0
        %414 = vmatpush2.msra.mxu0 0.0
        %415 = vmatprep.subr.mxu0 0.0
        %416 = vmatpush2.msra.mxu0 0.0
        %417 = vmatprep.subr.mxu0 0.0
        %418 = vmatpush2.msra.mxu0 0.0
        %419 = vmatprep.subr.mxu0 0.0
        %420 = vmatpush2.msra.mxu0 0.0
        %421 = vmatprep.subr.mxu0 0.0
        %422 = vmatpush2.msra.mxu0 0.0
        %423 = vmatprep.mubr.f32.mxu0 0.0
        %424 = vmatmul.mubr.f32.gmra.mxu0 %v336
        %v425 = vpop.f32.mrf.mxu0
        %v426 = vadd.f32 %v332, %v425
        %v427 = vpop.f32.mrf.mxu0
        %428 = vmatprep.mubr.f32.mxu0 0.0
        %429 = vmatmul.mubr.f32.gmra.mxu0 %v339
        %v430 = vpop.f32.mrf.mxu0
        %v431 = vadd.f32 %v332, %v430
        %v432 = vpop.f32.mrf.mxu0
        %433 = vmatprep.mubr.f32.mxu0 0.0
        %434 = vmatmul.mubr.f32.gmra.mxu0 %v342
        %v435 = vpop.f32.mrf.mxu0
        %v436 = vadd.f32 %v332, %v435
        %v437 = vpop.f32.mrf.mxu0
        %438 = vmatprep.mubr.f32.mxu0 0.0
        %439 = vmatmul.mubr.f32.gmra.mxu0 %v345
        %v440 = vpop.f32.mrf.mxu0
        %v441 = vadd.f32 %v332, %v440
        %v442 = vpop.f32.mrf.mxu0
        %443 = vmatprep.mubr.f32.mxu0 0.0
        %444 = vmatmul.mubr.f32.gmra.mxu0 %v348
        %v445 = vpop.f32.mrf.mxu0
        %v446 = vadd.f32 %v332, %v445
        %v447 = vpop.f32.mrf.mxu0
        %448 = vmatprep.mubr.f32.mxu0 0.0
        %449 = vmatmul.mubr.f32.gmra.mxu0 %v351
        %v450 = vpop.f32.mrf.mxu0
        %v451 = vadd.f32 %v332, %v450
        %v452 = vpop.f32.mrf.mxu0
        %453 = vmatprep.mubr.f32.mxu0 0.0
        %454 = vmatmul.mubr.f32.gmra.mxu0 %v354
        %v455 = vpop.f32.mrf.mxu0
        %v456 = vadd.f32 %v332, %v455
        %v457 = vpop.f32.mrf.mxu0
        %458 = vmatprep.mubr.f32.mxu0 0.0
        %459 = vmatmul.mubr.f32.gmra.mxu0 %v357
        %v460 = vpop.f32.mrf.mxu0
        %v461 = vadd.f32 %v332, %v460
        %v462 = vpop.f32.mrf.mxu0
        %463 = vdwg.mxu0
        %464 = vst [vmem:[#allocation3] sm:$0xff] %v426
        %465 = vst [vmem:[#allocation3 + $0x8] sm:$0xff] %v431
        %466 = vst [vmem:[#allocation3 + $0x10] sm:$0xff] %v436
        %467 = vst [vmem:[#allocation3 + $0x18] sm:$0xff] %v441
        %468 = vst [vmem:[#allocation3 + $0x20] sm:$0xff] %v446
        %469 = vst [vmem:[#allocation3 + $0x28] sm:$0xff] %v451
        %470 = vst [vmem:[#allocation3 + $0x30] sm:$0xff] %v456
        %471 = vst [vmem:[#allocation3 + $0x38] sm:$0xff] %v461
        %v472 = vld [vmem:[%s254] sm:$0xff]
        %v473 = vld [vmem:[%s254 + $0x8] sm:$0xff]
        %v474 = vld [vmem:[%s254 + $0x10] sm:$0xff]
        %v475 = vld [vmem:[%s254 + $0x18] sm:$0xff]
        %v476 = vld [vmem:[#allocation3] sm:$0xff]
        %v478 = vsel %vm334, 0.0, 0
        %480 = vmatprep.subr.mxu0 0.0
        %481 = vmatpush1.msra.mxu0 0.0
        %482 = vmatprep.subr.mxu0 0.0
        %483 = vmatpush1.msra.mxu0 0.0
        %484 = vmatprep.subr.mxu0 0.0
        %485 = vmatpush1.msra.mxu0 0.0
        %486 = vmatprep.subr.mxu0 0.0
        %487 = vmatpush1.msra.mxu0 0.0
        %488 = vmatprep.subr.mxu0 0.0
        %489 = vmatpush1.msra.mxu0 0.0
        %490 = vmatprep.subr.mxu0 0.0
        %491 = vmatpush1.msra.mxu0 0.0
        %492 = vmatprep.subr.mxu0 0.0
        %493 = vmatpush1.msra.mxu0 0.0
        %494 = vmatprep.subr.mxu0 0.0
        %495 = vmatpush1.msra.mxu0 0.0
        %496 = vmatprep.subr.mxu0 0.0
        %497 = vmatpush1.msra.mxu0 0.0
        %498 = vmatprep.subr.mxu0 0.0
        %499 = vmatpush1.msra.mxu0 0.0
        %500 = vmatprep.subr.mxu0 0.0
        %501 = vmatpush1.msra.mxu0 0.0
        %502 = vmatprep.subr.mxu0 0.0
        %503 = vmatpush1.msra.mxu0 0.0
        %504 = vmatprep.subr.mxu0 0.0
        %505 = vmatpush1.msra.mxu0 %v475
        %506 = vmatprep.subr.mxu0 0.0
        %507 = vmatpush1.msra.mxu0 %v474
        %508 = vmatprep.subr.mxu0 0.0
        %509 = vmatpush1.msra.mxu0 %v473
        %510 = vmatprep.subr.mxu0 0.0
        %511 = vmatpush1.msra.mxu0 %v472
        %512 = vmatprep.subr.mxu0 0.0
        %513 = vmatpush2.msra.mxu0 0.0
        %514 = vmatprep.subr.mxu0 0.0
        %515 = vmatpush2.msra.mxu0 0.0
        %516 = vmatprep.subr.mxu0 0.0
        %517 = vmatpush2.msra.mxu0 0.0
        %518 = vmatprep.subr.mxu0 0.0
        %519 = vmatpush2.msra.mxu0 0.0
        %520 = vmatprep.subr.mxu0 0.0
        %521 = vmatpush2.msra.mxu0 0.0
        %522 = vmatprep.subr.mxu0 0.0
        %523 = vmatpush2.msra.mxu0 0.0
        %524 = vmatprep.subr.mxu0 0.0
        %525 = vmatpush2.msra.mxu0 0.0
        %526 = vmatprep.subr.mxu0 0.0
        %527 = vmatpush2.msra.mxu0 0.0
        %528 = vmatprep.subr.mxu0 0.0
        %529 = vmatpush2.msra.mxu0 0.0
        %530 = vmatprep.subr.mxu0 0.0
        %531 = vmatpush2.msra.mxu0 0.0
        %532 = vmatprep.subr.mxu0 0.0
        %533 = vmatpush2.msra.mxu0 0.0
        %534 = vmatprep.subr.mxu0 0.0
        %535 = vmatpush2.msra.mxu0 0.0
        %536 = vmatprep.subr.mxu0 0.0
        %537 = vmatpush2.msra.mxu0 0.0
        %538 = vmatprep.subr.mxu0 0.0
        %539 = vmatpush2.msra.mxu0 0.0
        %540 = vmatprep.subr.mxu0 0.0
        %541 = vmatpush2.msra.mxu0 0.0
        %542 = vmatprep.subr.mxu0 0.0
        %543 = vmatpush2.msra.mxu0 0.0
        %544 = vmatprep.mubr.f32.mxu0 0.0
        %545 = vmatmul.mubr.f32.gmra.mxu0 %v478
        %v546 = vpop.f32.mrf.mxu0
        %v547 = vadd.f32 %v476, %v546
        %v548 = vpop.f32.mrf.mxu0
        %549 = vdwg.mxu0
        %v550 = vxor.u32 %v547, 2147483648
        %v551 = vmul.f32 %v550, 1.442695
        %v552 = vpow.pop %v551
        %v553 = vadd.f32 %v552, 1.0
        %v554 = vrcp.pop %v553
        %v555 = vmul.f32 1.0, %v554
        %v556 = vtanh.pop %v547
        %v557 = vmul.f32 %v555, 0.0
        %559 = vrot.lane.b32.xlu0 %v556, 64
        %v560 = vpop.permute.xlu0 %559
        %v562 = vmul.f32 %v555, %v560
        %564 = vrot.lane.b32.xlu0 %v562, 32
        %v565 = vpop.permute.xlu0 %564
        %v567 = vadd.f32 %v557, %v565
        %v568 = vtanh.pop %v567
        %570 = vrot.lane.b32.xlu0 %v568, 64
        %v571 = vpop.permute.xlu0 %570
        %v573 = vmul.f32 %v555, %v571
        %575 = vrot.lane.b32.xlu0 %v573, 32
        %v576 = vpop.permute.xlu0 %575
        %578 = vst.msk [vmem:[#allocation2] sm:$0xff] %vm334, %v576
        %v579 = vld [vmem:[#allocation3 + $0x8] sm:$0xff]
        %v580 = vsel %vm334, %v576, 0
        %582 = vmatprep.subr.mxu0 0.0
        %583 = vmatpush1.msra.mxu0 0.0
        %584 = vmatprep.subr.mxu0 0.0
        %585 = vmatpush1.msra.mxu0 0.0
        %586 = vmatprep.subr.mxu0 0.0
        %587 = vmatpush1.msra.mxu0 0.0
        %588 = vmatprep.subr.mxu0 0.0
        %589 = vmatpush1.msra.mxu0 0.0
        %590 = vmatprep.subr.mxu0 0.0
        %591 = vmatpush1.msra.mxu0 0.0
        %592 = vmatprep.subr.mxu0 0.0
        %593 = vmatpush1.msra.mxu0 0.0
        %594 = vmatprep.subr.mxu0 0.0
        %595 = vmatpush1.msra.mxu0 0.0
        %596 = vmatprep.subr.mxu0 0.0
        %597 = vmatpush1.msra.mxu0 0.0
        %598 = vmatprep.subr.mxu0 0.0
        %599 = vmatpush1.msra.mxu0 0.0
        %600 = vmatprep.subr.mxu0 0.0
        %601 = vmatpush1.msra.mxu0 0.0
        %602 = vmatprep.subr.mxu0 0.0
        %603 = vmatpush1.msra.mxu0 0.0
        %604 = vmatprep.subr.mxu0 0.0
        %605 = vmatpush1.msra.mxu0 0.0
        %606 = vmatprep.subr.mxu0 0.0
        %607 = vmatpush1.msra.mxu0 %v475
        %608 = vmatprep.subr.mxu0 0.0
        %609 = vmatpush1.msra.mxu0 %v474
        %610 = vmatprep.subr.mxu0 0.0
        %611 = vmatpush1.msra.mxu0 %v473
        %612 = vmatprep.subr.mxu0 0.0
        %613 = vmatpush1.msra.mxu0 %v472
        %614 = vmatprep.subr.mxu0 0.0
        %615 = vmatpush2.msra.mxu0 0.0
        %616 = vmatprep.subr.mxu0 0.0
        %617 = vmatpush2.msra.mxu0 0.0
        %618 = vmatprep.subr.mxu0 0.0
        %619 = vmatpush2.msra.mxu0 0.0
        %620 = vmatprep.subr.mxu0 0.0
        %621 = vmatpush2.msra.mxu0 0.0
        %622 = vmatprep.subr.mxu0 0.0
        %623 = vmatpush2.msra.mxu0 0.0
        %624 = vmatprep.subr.mxu0 0.0
        %625 = vmatpush2.msra.mxu0 0.0
        %626 = vmatprep.subr.mxu0 0.0
        %627 = vmatpush2.msra.mxu0 0.0
        %628 = vmatprep.subr.mxu0 0.0
        %629 = vmatpush2.msra.mxu0 0.0
        %630 = vmatprep.subr.mxu0 0.0
        %631 = vmatpush2.msra.mxu0 0.0
        %632 = vmatprep.subr.mxu0 0.0
        %633 = vmatpush2.msra.mxu0 0.0
        %634 = vmatprep.subr.mxu0 0.0
        %635 = vmatpush2.msra.mxu0 0.0
        %636 = vmatprep.subr.mxu0 0.0
        %637 = vmatpush2.msra.mxu0 0.0
        %638 = vmatprep.subr.mxu0 0.0
        %639 = vmatpush2.msra.mxu0 0.0
        %640 = vmatprep.subr.mxu0 0.0
        %641 = vmatpush2.msra.mxu0 0.0
        %642 = vmatprep.subr.mxu0 0.0
        %643 = vmatpush2.msra.mxu0 0.0
        %644 = vmatprep.subr.mxu0 0.0
        %645 = vmatpush2.msra.mxu0 0.0
        %646 = vmatprep.mubr.f32.mxu0 0.0
        %647 = vmatmul.mubr.f32.gmra.mxu0 %v580
        %v648 = vpop.f32.mrf.mxu0
        %v649 = vadd.f32 %v579, %v648
        %v650 = vpop.f32.mrf.mxu0
        %651 = vdwg.mxu0
        %v652 = vxor.u32 %v649, 2147483648
        %v653 = vmul.f32 %v652, 1.442695
        %v654 = vpow.pop %v653
        %v655 = vadd.f32 %v654, 1.0
        %v656 = vrcp.pop %v655
        %v657 = vmul.f32 1.0, %v656
        %v658 = vtanh.pop %v649
        %v659 = vmul.f32 %v657, %v567
        %661 = vrot.lane.b32.xlu0 %v658, 64
        %v662 = vpop.permute.xlu0 %661
        %v664 = vmul.f32 %v657, %v662
        %666 = vrot.lane.b32.xlu0 %v664, 32
        %v667 = vpop.permute.xlu0 %666
        %v669 = vadd.f32 %v659, %v667
        %v670 = vtanh.pop %v669
        %672 = vrot.lane.b32.xlu0 %v670, 64
        %v673 = vpop.permute.xlu0 %672
        %v675 = vmul.f32 %v657, %v673
        %677 = vrot.lane.b32.xlu0 %v675, 32
        %v678 = vpop.permute.xlu0 %677
        %680 = vst.msk [vmem:[#allocation2 + $0x8] sm:$0xff] %vm334, %v678
        %v681 = vld [vmem:[#allocation3 + $0x10] sm:$0xff]
        %v682 = vsel %vm334, %v678, 0
        %684 = vmatprep.subr.mxu0 0.0
        %685 = vmatpush1.msra.mxu0 0.0
        %686 = vmatprep.subr.mxu0 0.0
        %687 = vmatpush1.msra.mxu0 0.0
        %688 = vmatprep.subr.mxu0 0.0
        %689 = vmatpush1.msra.mxu0 0.0
        %690 = vmatprep.subr.mxu0 0.0
        %691 = vmatpush1.msra.mxu0 0.0
        %692 = vmatprep.subr.mxu0 0.0
        %693 = vmatpush1.msra.mxu0 0.0
        %694 = vmatprep.subr.mxu0 0.0
        %695 = vmatpush1.msra.mxu0 0.0
        %696 = vmatprep.subr.mxu0 0.0
        %697 = vmatpush1.msra.mxu0 0.0
        %698 = vmatprep.subr.mxu0 0.0
        %699 = vmatpush1.msra.mxu0 0.0
        %700 = vmatprep.subr.mxu0 0.0
        %701 = vmatpush1.msra.mxu0 0.0
        %702 = vmatprep.subr.mxu0 0.0
        %703 = vmatpush1.msra.mxu0 0.0
        %704 = vmatprep.subr.mxu0 0.0
        %705 = vmatpush1.msra.mxu0 0.0
        %706 = vmatprep.subr.mxu0 0.0
        %707 = vmatpush1.msra.mxu0 0.0
        %708 = vmatprep.subr.mxu0 0.0
        %709 = vmatpush1.msra.mxu0 %v475
        %710 = vmatprep.subr.mxu0 0.0
        %711 = vmatpush1.msra.mxu0 %v474
        %712 = vmatprep.subr.mxu0 0.0
        %713 = vmatpush1.msra.mxu0 %v473
        %714 = vmatprep.subr.mxu0 0.0
        %715 = vmatpush1.msra.mxu0 %v472
        %716 = vmatprep.subr.mxu0 0.0
        %717 = vmatpush2.msra.mxu0 0.0
        %718 = vmatprep.subr.mxu0 0.0
        %719 = vmatpush2.msra.mxu0 0.0
        %720 = vmatprep.subr.mxu0 0.0
        %721 = vmatpush2.msra.mxu0 0.0
        %722 = vmatprep.subr.mxu0 0.0
        %723 = vmatpush2.msra.mxu0 0.0
        %724 = vmatprep.subr.mxu0 0.0
        %725 = vmatpush2.msra.mxu0 0.0
        %726 = vmatprep.subr.mxu0 0.0
        %727 = vmatpush2.msra.mxu0 0.0
        %728 = vmatprep.subr.mxu0 0.0
        %729 = vmatpush2.msra.mxu0 0.0
        %730 = vmatprep.subr.mxu0 0.0
        %731 = vmatpush2.msra.mxu0 0.0
        %732 = vmatprep.subr.mxu0 0.0
        %733 = vmatpush2.msra.mxu0 0.0
        %734 = vmatprep.subr.mxu0 0.0
        %735 = vmatpush2.msra.mxu0 0.0
        %736 = vmatprep.subr.mxu0 0.0
        %737 = vmatpush2.msra.mxu0 0.0
        %738 = vmatprep.subr.mxu0 0.0
        %739 = vmatpush2.msra.mxu0 0.0
        %740 = vmatprep.subr.mxu0 0.0
        %741 = vmatpush2.msra.mxu0 0.0
        %742 = vmatprep.subr.mxu0 0.0
        %743 = vmatpush2.msra.mxu0 0.0
        %744 = vmatprep.subr.mxu0 0.0
        %745 = vmatpush2.msra.mxu0 0.0
        %746 = vmatprep.subr.mxu0 0.0
        %747 = vmatpush2.msra.mxu0 0.0
        %748 = vmatprep.mubr.f32.mxu0 0.0
        %749 = vmatmul.mubr.f32.gmra.mxu0 %v682
        %v750 = vpop.f32.mrf.mxu0
        %v751 = vadd.f32 %v681, %v750
        %v752 = vpop.f32.mrf.mxu0
        %753 = vdwg.mxu0
        %v754 = vxor.u32 %v751, 2147483648
        %v755 = vmul.f32 %v754, 1.442695
        %v756 = vpow.pop %v755
        %v757 = vadd.f32 %v756, 1.0
        %v758 = vrcp.pop %v757
        %v759 = vmul.f32 1.0, %v758
        %v760 = vtanh.pop %v751
        %v761 = vmul.f32 %v759, %v669
        %763 = vrot.lane.b32.xlu0 %v760, 64
        %v764 = vpop.permute.xlu0 %763
        %v766 = vmul.f32 %v759, %v764
        %768 = vrot.lane.b32.xlu0 %v766, 32
        %v769 = vpop.permute.xlu0 %768
        %v771 = vadd.f32 %v761, %v769
        %v772 = vtanh.pop %v771
        %774 = vrot.lane.b32.xlu0 %v772, 64
        %v775 = vpop.permute.xlu0 %774
        %v777 = vmul.f32 %v759, %v775
        %779 = vrot.lane.b32.xlu0 %v777, 32
        %v780 = vpop.permute.xlu0 %779
        %782 = vst.msk [vmem:[#allocation2 + $0x10] sm:$0xff] %vm334, %v780
        %v783 = vld [vmem:[#allocation3 + $0x18] sm:$0xff]
        %v784 = vsel %vm334, %v780, 0
        %786 = vmatprep.subr.mxu0 0.0
        %787 = vmatpush1.msra.mxu0 0.0
        %788 = vmatprep.subr.mxu0 0.0
        %789 = vmatpush1.msra.mxu0 0.0
        %790 = vmatprep.subr.mxu0 0.0
        %791 = vmatpush1.msra.mxu0 0.0
        %792 = vmatprep.subr.mxu0 0.0
        %793 = vmatpush1.msra.mxu0 0.0
        %794 = vmatprep.subr.mxu0 0.0
        %795 = vmatpush1.msra.mxu0 0.0
        %796 = vmatprep.subr.mxu0 0.0
        %797 = vmatpush1.msra.mxu0 0.0
        %798 = vmatprep.subr.mxu0 0.0
        %799 = vmatpush1.msra.mxu0 0.0
        %800 = vmatprep.subr.mxu0 0.0
        %801 = vmatpush1.msra.mxu0 0.0
        %802 = vmatprep.subr.mxu0 0.0
        %803 = vmatpush1.msra.mxu0 0.0
        %804 = vmatprep.subr.mxu0 0.0
        %805 = vmatpush1.msra.mxu0 0.0
        %806 = vmatprep.subr.mxu0 0.0
        %807 = vmatpush1.msra.mxu0 0.0
        %808 = vmatprep.subr.mxu0 0.0
        %809 = vmatpush1.msra.mxu0 0.0
        %810 = vmatprep.subr.mxu0 0.0
        %811 = vmatpush1.msra.mxu0 %v475
        %812 = vmatprep.subr.mxu0 0.0
        %813 = vmatpush1.msra.mxu0 %v474
        %814 = vmatprep.subr.mxu0 0.0
        %815 = vmatpush1.msra.mxu0 %v473
        %816 = vmatprep.subr.mxu0 0.0
        %817 = vmatpush1.msra.mxu0 %v472
        %818 = vmatprep.subr.mxu0 0.0
        %819 = vmatpush2.msra.mxu0 0.0
        %820 = vmatprep.subr.mxu0 0.0
        %821 = vmatpush2.msra.mxu0 0.0
        %822 = vmatprep.subr.mxu0 0.0
        %823 = vmatpush2.msra.mxu0 0.0
        %824 = vmatprep.subr.mxu0 0.0
        %825 = vmatpush2.msra.mxu0 0.0
        %826 = vmatprep.subr.mxu0 0.0
        %827 = vmatpush2.msra.mxu0 0.0
        %828 = vmatprep.subr.mxu0 0.0
        %829 = vmatpush2.msra.mxu0 0.0
        %830 = vmatprep.subr.mxu0 0.0
        %831 = vmatpush2.msra.mxu0 0.0
        %832 = vmatprep.subr.mxu0 0.0
        %833 = vmatpush2.msra.mxu0 0.0
        %834 = vmatprep.subr.mxu0 0.0
        %835 = vmatpush2.msra.mxu0 0.0
        %836 = vmatprep.subr.mxu0 0.0
        %837 = vmatpush2.msra.mxu0 0.0
        %838 = vmatprep.subr.mxu0 0.0
        %839 = vmatpush2.msra.mxu0 0.0
        %840 = vmatprep.subr.mxu0 0.0
        %841 = vmatpush2.msra.mxu0 0.0
        %842 = vmatprep.subr.mxu0 0.0
        %843 = vmatpush2.msra.mxu0 0.0
        %844 = vmatprep.subr.mxu0 0.0
        %845 = vmatpush2.msra.mxu0 0.0
        %846 = vmatprep.subr.mxu0 0.0
        %847 = vmatpush2.msra.mxu0 0.0
        %848 = vmatprep.subr.mxu0 0.0
        %849 = vmatpush2.msra.mxu0 0.0
        %850 = vmatprep.mubr.f32.mxu0 0.0
        %851 = vmatmul.mubr.f32.gmra.mxu0 %v784
        %v852 = vpop.f32.mrf.mxu0
        %v853 = vadd.f32 %v783, %v852
        %v854 = vpop.f32.mrf.mxu0
        %855 = vdwg.mxu0
        %v856 = vxor.u32 %v853, 2147483648
        %v857 = vmul.f32 %v856, 1.442695
        %v858 = vpow.pop %v857
        %v859 = vadd.f32 %v858, 1.0
        %v860 = vrcp.pop %v859
        %v861 = vmul.f32 1.0, %v860
        %v862 = vtanh.pop %v853
        %v863 = vmul.f32 %v861, %v771
        %865 = vrot.lane.b32.xlu0 %v862, 64
        %v866 = vpop.permute.xlu0 %865
        %v868 = vmul.f32 %v861, %v866
        %870 = vrot.lane.b32.xlu0 %v868, 32
        %v871 = vpop.permute.xlu0 %870
        %v873 = vadd.f32 %v863, %v871
        %v874 = vtanh.pop %v873
        %876 = vrot.lane.b32.xlu0 %v874, 64
        %v877 = vpop.permute.xlu0 %876
        %v879 = vmul.f32 %v861, %v877
        %881 = vrot.lane.b32.xlu0 %v879, 32
        %v882 = vpop.permute.xlu0 %881
        %884 = vst.msk [vmem:[#allocation2 + $0x18] sm:$0xff] %vm334, %v882
        %v885 = vld [vmem:[#allocation3 + $0x20] sm:$0xff]
        %v886 = vsel %vm334, %v882, 0
        %888 = vmatprep.subr.mxu0 0.0
        %889 = vmatpush1.msra.mxu0 0.0
        %890 = vmatprep.subr.mxu0 0.0
        %891 = vmatpush1.msra.mxu0 0.0
        %892 = vmatprep.subr.mxu0 0.0
        %893 = vmatpush1.msra.mxu0 0.0
        %894 = vmatprep.subr.mxu0 0.0
        %895 = vmatpush1.msra.mxu0 0.0
        %896 = vmatprep.subr.mxu0 0.0
        %897 = vmatpush1.msra.mxu0 0.0
        %898 = vmatprep.subr.mxu0 0.0
        %899 = vmatpush1.msra.mxu0 0.0
        %900 = vmatprep.subr.mxu0 0.0
        %901 = vmatpush1.msra.mxu0 0.0
        %902 = vmatprep.subr.mxu0 0.0
        %903 = vmatpush1.msra.mxu0 0.0
        %904 = vmatprep.subr.mxu0 0.0
        %905 = vmatpush1.msra.mxu0 0.0
        %906 = vmatprep.subr.mxu0 0.0
        %907 = vmatpush1.msra.mxu0 0.0
        %908 = vmatprep.subr.mxu0 0.0
        %909 = vmatpush1.msra.mxu0 0.0
        %910 = vmatprep.subr.mxu0 0.0
        %911 = vmatpush1.msra.mxu0 0.0
        %912 = vmatprep.subr.mxu0 0.0
        %913 = vmatpush1.msra.mxu0 %v475
        %914 = vmatprep.subr.mxu0 0.0
        %915 = vmatpush1.msra.mxu0 %v474
        %916 = vmatprep.subr.mxu0 0.0
        %917 = vmatpush1.msra.mxu0 %v473
        %918 = vmatprep.subr.mxu0 0.0
        %919 = vmatpush1.msra.mxu0 %v472
        %920 = vmatprep.subr.mxu0 0.0
        %921 = vmatpush2.msra.mxu0 0.0
        %922 = vmatprep.subr.mxu0 0.0
        %923 = vmatpush2.msra.mxu0 0.0
        %924 = vmatprep.subr.mxu0 0.0
        %925 = vmatpush2.msra.mxu0 0.0
        %926 = vmatprep.subr.mxu0 0.0
        %927 = vmatpush2.msra.mxu0 0.0
        %928 = vmatprep.subr.mxu0 0.0
        %929 = vmatpush2.msra.mxu0 0.0
        %930 = vmatprep.subr.mxu0 0.0
        %931 = vmatpush2.msra.mxu0 0.0
        %932 = vmatprep.subr.mxu0 0.0
        %933 = vmatpush2.msra.mxu0 0.0
        %934 = vmatprep.subr.mxu0 0.0
        %935 = vmatpush2.msra.mxu0 0.0
        %936 = vmatprep.subr.mxu0 0.0
        %937 = vmatpush2.msra.mxu0 0.0
        %938 = vmatprep.subr.mxu0 0.0
        %939 = vmatpush2.msra.mxu0 0.0
        %940 = vmatprep.subr.mxu0 0.0
        %941 = vmatpush2.msra.mxu0 0.0
        %942 = vmatprep.subr.mxu0 0.0
        %943 = vmatpush2.msra.mxu0 0.0
        %944 = vmatprep.subr.mxu0 0.0
        %945 = vmatpush2.msra.mxu0 0.0
        %946 = vmatprep.subr.mxu0 0.0
        %947 = vmatpush2.msra.mxu0 0.0
        %948 = vmatprep.subr.mxu0 0.0
        %949 = vmatpush2.msra.mxu0 0.0
        %950 = vmatprep.subr.mxu0 0.0
        %951 = vmatpush2.msra.mxu0 0.0
        %952 = vmatprep.mubr.f32.mxu0 0.0
        %953 = vmatmul.mubr.f32.gmra.mxu0 %v886
        %v954 = vpop.f32.mrf.mxu0
        %v955 = vadd.f32 %v885, %v954
        %v956 = vpop.f32.mrf.mxu0
        %957 = vdwg.mxu0
        %v958 = vxor.u32 %v955, 2147483648
        %v959 = vmul.f32 %v958, 1.442695
        %v960 = vpow.pop %v959
        %v961 = vadd.f32 %v960, 1.0
        %v962 = vrcp.pop %v961
        %v963 = vmul.f32 1.0, %v962
        %v964 = vtanh.pop %v955
        %v965 = vmul.f32 %v963, %v873
        %967 = vrot.lane.b32.xlu0 %v964, 64
        %v968 = vpop.permute.xlu0 %967
        %v970 = vmul.f32 %v963, %v968
        %972 = vrot.lane.b32.xlu0 %v970, 32
        %v973 = vpop.permute.xlu0 %972
        %v975 = vadd.f32 %v965, %v973
        %v976 = vtanh.pop %v975
        %978 = vrot.lane.b32.xlu0 %v976, 64
        %v979 = vpop.permute.xlu0 %978
        %v981 = vmul.f32 %v963, %v979
        %983 = vrot.lane.b32.xlu0 %v981, 32
        %v984 = vpop.permute.xlu0 %983
        %986 = vst.msk [vmem:[#allocation2 + $0x20] sm:$0xff] %vm334, %v984
        %v987 = vld [vmem:[#allocation3 + $0x28] sm:$0xff]
        %v988 = vsel %vm334, %v984, 0
        %990 = vmatprep.subr.mxu0 0.0
        %991 = vmatpush1.msra.mxu0 0.0
        %992 = vmatprep.subr.mxu0 0.0
        %993 = vmatpush1.msra.mxu0 0.0
        %994 = vmatprep.subr.mxu0 0.0
        %995 = vmatpush1.msra.mxu0 0.0
        %996 = vmatprep.subr.mxu0 0.0
        %997 = vmatpush1.msra.mxu0 0.0
        %998 = vmatprep.subr.mxu0 0.0
        %999 = vmatpush1.msra.mxu0 0.0
        %1000 = vmatprep.subr.mxu0 0.0
        %1001 = vmatpush1.msra.mxu0 0.0
        %1002 = vmatprep.subr.mxu0 0.0
        %1003 = vmatpush1.msra.mxu0 0.0
        %1004 = vmatprep.subr.mxu0 0.0
        %1005 = vmatpush1.msra.mxu0 0.0
        %1006 = vmatprep.subr.mxu0 0.0
        %1007 = vmatpush1.msra.mxu0 0.0
        %1008 = vmatprep.subr.mxu0 0.0
        %1009 = vmatpush1.msra.mxu0 0.0
        %1010 = vmatprep.subr.mxu0 0.0
        %1011 = vmatpush1.msra.mxu0 0.0
        %1012 = vmatprep.subr.mxu0 0.0
        %1013 = vmatpush1.msra.mxu0 0.0
        %1014 = vmatprep.subr.mxu0 0.0
        %1015 = vmatpush1.msra.mxu0 %v475
        %1016 = vmatprep.subr.mxu0 0.0
        %1017 = vmatpush1.msra.mxu0 %v474
        %1018 = vmatprep.subr.mxu0 0.0
        %1019 = vmatpush1.msra.mxu0 %v473
        %1020 = vmatprep.subr.mxu0 0.0
        %1021 = vmatpush1.msra.mxu0 %v472
        %1022 = vmatprep.subr.mxu0 0.0
        %1023 = vmatpush2.msra.mxu0 0.0
        %1024 = vmatprep.subr.mxu0 0.0
        %1025 = vmatpush2.msra.mxu0 0.0
        %1026 = vmatprep.subr.mxu0 0.0
        %1027 = vmatpush2.msra.mxu0 0.0
        %1028 = vmatprep.subr.mxu0 0.0
        %1029 = vmatpush2.msra.mxu0 0.0
        %1030 = vmatprep.subr.mxu0 0.0
        %1031 = vmatpush2.msra.mxu0 0.0
        %1032 = vmatprep.subr.mxu0 0.0
        %1033 = vmatpush2.msra.mxu0 0.0
        %1034 = vmatprep.subr.mxu0 0.0
        %1035 = vmatpush2.msra.mxu0 0.0
        %1036 = vmatprep.subr.mxu0 0.0
        %1037 = vmatpush2.msra.mxu0 0.0
        %1038 = vmatprep.subr.mxu0 0.0
        %1039 = vmatpush2.msra.mxu0 0.0
        %1040 = vmatprep.subr.mxu0 0.0
        %1041 = vmatpush2.msra.mxu0 0.0
        %1042 = vmatprep.subr.mxu0 0.0
        %1043 = vmatpush2.msra.mxu0 0.0
        %1044 = vmatprep.subr.mxu0 0.0
        %1045 = vmatpush2.msra.mxu0 0.0
        %1046 = vmatprep.subr.mxu0 0.0
        %1047 = vmatpush2.msra.mxu0 0.0
        %1048 = vmatprep.subr.mxu0 0.0
        %1049 = vmatpush2.msra.mxu0 0.0
        %1050 = vmatprep.subr.mxu0 0.0
        %1051 = vmatpush2.msra.mxu0 0.0
        %1052 = vmatprep.subr.mxu0 0.0
        %1053 = vmatpush2.msra.mxu0 0.0
        %1054 = vmatprep.mubr.f32.mxu0 0.0
        %1055 = vmatmul.mubr.f32.gmra.mxu0 %v988
        %v1056 = vpop.f32.mrf.mxu0
        %v1057 = vadd.f32 %v987, %v1056
        %v1058 = vpop.f32.mrf.mxu0
        %1059 = vdwg.mxu0
        %v1060 = vxor.u32 %v1057, 2147483648
        %v1061 = vmul.f32 %v1060, 1.442695
        %v1062 = vpow.pop %v1061
        %v1063 = vadd.f32 %v1062, 1.0
        %v1064 = vrcp.pop %v1063
        %v1065 = vmul.f32 1.0, %v1064
        %v1066 = vtanh.pop %v1057
        %v1067 = vmul.f32 %v1065, %v975
        %1069 = vrot.lane.b32.xlu0 %v1066, 64
        %v1070 = vpop.permute.xlu0 %1069
        %v1072 = vmul.f32 %v1065, %v1070
        %1074 = vrot.lane.b32.xlu0 %v1072, 32
        %v1075 = vpop.permute.xlu0 %1074
        %v1077 = vadd.f32 %v1067, %v1075
        %v1078 = vtanh.pop %v1077
        %1080 = vrot.lane.b32.xlu0 %v1078, 64
        %v1081 = vpop.permute.xlu0 %1080
        %v1083 = vmul.f32 %v1065, %v1081
        %1085 = vrot.lane.b32.xlu0 %v1083, 32
        %v1086 = vpop.permute.xlu0 %1085
        %1088 = vst.msk [vmem:[#allocation2 + $0x28] sm:$0xff] %vm334, %v1086
        %v1089 = vld [vmem:[#allocation3 + $0x30] sm:$0xff]
        %v1090 = vsel %vm334, %v1086, 0
        %1092 = vmatprep.subr.mxu0 0.0
        %1093 = vmatpush1.msra.mxu0 0.0
        %1094 = vmatprep.subr.mxu0 0.0
        %1095 = vmatpush1.msra.mxu0 0.0
        %1096 = vmatprep.subr.mxu0 0.0
        %1097 = vmatpush1.msra.mxu0 0.0
        %1098 = vmatprep.subr.mxu0 0.0
        %1099 = vmatpush1.msra.mxu0 0.0
        %1100 = vmatprep.subr.mxu0 0.0
        %1101 = vmatpush1.msra.mxu0 0.0
        %1102 = vmatprep.subr.mxu0 0.0
        %1103 = vmatpush1.msra.mxu0 0.0
        %1104 = vmatprep.subr.mxu0 0.0
        %1105 = vmatpush1.msra.mxu0 0.0
        %1106 = vmatprep.subr.mxu0 0.0
        %1107 = vmatpush1.msra.mxu0 0.0
        %1108 = vmatprep.subr.mxu0 0.0
        %1109 = vmatpush1.msra.mxu0 0.0
        %1110 = vmatprep.subr.mxu0 0.0
        %1111 = vmatpush1.msra.mxu0 0.0
        %1112 = vmatprep.subr.mxu0 0.0
        %1113 = vmatpush1.msra.mxu0 0.0
        %1114 = vmatprep.subr.mxu0 0.0
        %1115 = vmatpush1.msra.mxu0 0.0
        %1116 = vmatprep.subr.mxu0 0.0
        %1117 = vmatpush1.msra.mxu0 %v475
        %1118 = vmatprep.subr.mxu0 0.0
        %1119 = vmatpush1.msra.mxu0 %v474
        %1120 = vmatprep.subr.mxu0 0.0
        %1121 = vmatpush1.msra.mxu0 %v473
        %1122 = vmatprep.subr.mxu0 0.0
        %1123 = vmatpush1.msra.mxu0 %v472
        %1124 = vmatprep.subr.mxu0 0.0
        %1125 = vmatpush2.msra.mxu0 0.0
        %1126 = vmatprep.subr.mxu0 0.0
        %1127 = vmatpush2.msra.mxu0 0.0
        %1128 = vmatprep.subr.mxu0 0.0
        %1129 = vmatpush2.msra.mxu0 0.0
        %1130 = vmatprep.subr.mxu0 0.0
        %1131 = vmatpush2.msra.mxu0 0.0
        %1132 = vmatprep.subr.mxu0 0.0
        %1133 = vmatpush2.msra.mxu0 0.0
        %1134 = vmatprep.subr.mxu0 0.0
        %1135 = vmatpush2.msra.mxu0 0.0
        %1136 = vmatprep.subr.mxu0 0.0
        %1137 = vmatpush2.msra.mxu0 0.0
        %1138 = vmatprep.subr.mxu0 0.0
        %1139 = vmatpush2.msra.mxu0 0.0
        %1140 = vmatprep.subr.mxu0 0.0
        %1141 = vmatpush2.msra.mxu0 0.0
        %1142 = vmatprep.subr.mxu0 0.0
        %1143 = vmatpush2.msra.mxu0 0.0
        %1144 = vmatprep.subr.mxu0 0.0
        %1145 = vmatpush2.msra.mxu0 0.0
        %1146 = vmatprep.subr.mxu0 0.0
        %1147 = vmatpush2.msra.mxu0 0.0
        %1148 = vmatprep.subr.mxu0 0.0
        %1149 = vmatpush2.msra.mxu0 0.0
        %1150 = vmatprep.subr.mxu0 0.0
        %1151 = vmatpush2.msra.mxu0 0.0
        %1152 = vmatprep.subr.mxu0 0.0
        %1153 = vmatpush2.msra.mxu0 0.0
        %1154 = vmatprep.subr.mxu0 0.0
        %1155 = vmatpush2.msra.mxu0 0.0
        %1156 = vmatprep.mubr.f32.mxu0 0.0
        %1157 = vmatmul.mubr.f32.gmra.mxu0 %v1090
        %v1158 = vpop.f32.mrf.mxu0
        %v1159 = vadd.f32 %v1089, %v1158
        %v1160 = vpop.f32.mrf.mxu0
        %1161 = vdwg.mxu0
        %v1162 = vxor.u32 %v1159, 2147483648
        %v1163 = vmul.f32 %v1162, 1.442695
        %v1164 = vpow.pop %v1163
        %v1165 = vadd.f32 %v1164, 1.0
        %v1166 = vrcp.pop %v1165
        %v1167 = vmul.f32 1.0, %v1166
        %v1168 = vtanh.pop %v1159
        %v1169 = vmul.f32 %v1167, %v1077
        %1171 = vrot.lane.b32.xlu0 %v1168, 64
        %v1172 = vpop.permute.xlu0 %1171
        %v1174 = vmul.f32 %v1167, %v1172
        %1176 = vrot.lane.b32.xlu0 %v1174, 32
        %v1177 = vpop.permute.xlu0 %1176
        %v1179 = vadd.f32 %v1169, %v1177
        %v1180 = vtanh.pop %v1179
        %1182 = vrot.lane.b32.xlu0 %v1180, 64
        %v1183 = vpop.permute.xlu0 %1182
        %v1185 = vmul.f32 %v1167, %v1183
        %1187 = vrot.lane.b32.xlu0 %v1185, 32
        %v1188 = vpop.permute.xlu0 %1187
        %1190 = vst.msk [vmem:[#allocation2 + $0x30] sm:$0xff] %vm334, %v1188
        %v1191 = vld [vmem:[#allocation3 + $0x38] sm:$0xff]
        %v1192 = vsel %vm334, %v1188, 0
        %1194 = vmatprep.subr.mxu0 0.0
        %1195 = vmatpush1.msra.mxu0 0.0
        %1196 = vmatprep.subr.mxu0 0.0
        %1197 = vmatpush1.msra.mxu0 0.0
        %1198 = vmatprep.subr.mxu0 0.0
        %1199 = vmatpush1.msra.mxu0 0.0
        %1200 = vmatprep.subr.mxu0 0.0
        %1201 = vmatpush1.msra.mxu0 0.0
        %1202 = vmatprep.subr.mxu0 0.0
        %1203 = vmatpush1.msra.mxu0 0.0
        %1204 = vmatprep.subr.mxu0 0.0
        %1205 = vmatpush1.msra.mxu0 0.0
        %1206 = vmatprep.subr.mxu0 0.0
        %1207 = vmatpush1.msra.mxu0 0.0
        %1208 = vmatprep.subr.mxu0 0.0
        %1209 = vmatpush1.msra.mxu0 0.0
        %1210 = vmatprep.subr.mxu0 0.0
        %1211 = vmatpush1.msra.mxu0 0.0
        %1212 = vmatprep.subr.mxu0 0.0
        %1213 = vmatpush1.msra.mxu0 0.0
        %1214 = vmatprep.subr.mxu0 0.0
        %1215 = vmatpush1.msra.mxu0 0.0
        %1216 = vmatprep.subr.mxu0 0.0
        %1217 = vmatpush1.msra.mxu0 0.0
        %1218 = vmatprep.subr.mxu0 0.0
        %1219 = vmatpush1.msra.mxu0 %v475
        %1220 = vmatprep.subr.mxu0 0.0
        %1221 = vmatpush1.msra.mxu0 %v474
        %1222 = vmatprep.subr.mxu0 0.0
        %1223 = vmatpush1.msra.mxu0 %v473
        %1224 = vmatprep.subr.mxu0 0.0
        %1225 = vmatpush1.msra.mxu0 %v472
        %1226 = vmatprep.subr.mxu0 0.0
        %1227 = vmatpush2.msra.mxu0 0.0
        %1228 = vmatprep.subr.mxu0 0.0
        %1229 = vmatpush2.msra.mxu0 0.0
        %1230 = vmatprep.subr.mxu0 0.0
        %1231 = vmatpush2.msra.mxu0 0.0
        %1232 = vmatprep.subr.mxu0 0.0
        %1233 = vmatpush2.msra.mxu0 0.0
        %1234 = vmatprep.subr.mxu0 0.0
        %1235 = vmatpush2.msra.mxu0 0.0
        %1236 = vmatprep.subr.mxu0 0.0
        %1237 = vmatpush2.msra.mxu0 0.0
        %1238 = vmatprep.subr.mxu0 0.0
        %1239 = vmatpush2.msra.mxu0 0.0
        %1240 = vmatprep.subr.mxu0 0.0
        %1241 = vmatpush2.msra.mxu0 0.0
        %1242 = vmatprep.subr.mxu0 0.0
        %1243 = vmatpush2.msra.mxu0 0.0
        %1244 = vmatprep.subr.mxu0 0.0
        %1245 = vmatpush2.msra.mxu0 0.0
        %1246 = vmatprep.subr.mxu0 0.0
        %1247 = vmatpush2.msra.mxu0 0.0
        %1248 = vmatprep.subr.mxu0 0.0
        %1249 = vmatpush2.msra.mxu0 0.0
        %1250 = vmatprep.subr.mxu0 0.0
        %1251 = vmatpush2.msra.mxu0 0.0
        %1252 = vmatprep.subr.mxu0 0.0
        %1253 = vmatpush2.msra.mxu0 0.0
        %1254 = vmatprep.subr.mxu0 0.0
        %1255 = vmatpush2.msra.mxu0 0.0
        %1256 = vmatprep.subr.mxu0 0.0
        %1257 = vmatpush2.msra.mxu0 0.0
        %1258 = vmatprep.mubr.f32.mxu0 0.0
        %1259 = vmatmul.mubr.f32.gmra.mxu0 %v1192
        %v1260 = vpop.f32.mrf.mxu0
        %v1261 = vadd.f32 %v1191, %v1260
        %v1262 = vpop.f32.mrf.mxu0
        %1263 = vdwg.mxu0
        %v1264 = vxor.u32 %v1261, 2147483648
        %v1265 = vmul.f32 %v1264, 1.442695
        %v1266 = vpow.pop %v1265
        %v1267 = vadd.f32 %v1266, 1.0
        %v1268 = vrcp.pop %v1267
        %v1269 = vmul.f32 1.0, %v1268
        %v1270 = vtanh.pop %v1261
        %v1271 = vmul.f32 %v1269, %v1179
        %1273 = vrot.lane.b32.xlu0 %v1270, 64
        %v1274 = vpop.permute.xlu0 %1273
        %v1276 = vmul.f32 %v1269, %v1274
        %1278 = vrot.lane.b32.xlu0 %v1276, 32
        %v1279 = vpop.permute.xlu0 %1278
        %v1281 = vadd.f32 %v1271, %v1279
        %v1282 = vtanh.pop %v1281
        %1284 = vrot.lane.b32.xlu0 %v1282, 64
        %v1285 = vpop.permute.xlu0 %1284
        %v1287 = vmul.f32 %v1269, %v1285
        %1289 = vrot.lane.b32.xlu0 %v1287, 32
        %v1290 = vpop.permute.xlu0 %1289
        %1292 = vst.msk [vmem:[#allocation2 + $0x38] sm:$0xff] %vm334, %v1290
        %p1293 = scmp.eq.s32.totalorder %s23, 1
        // Predicated region
        $region53: #{tpu_custom_call.1} parent=43 // pred_check
          %p1294 = pneg %p1293
        $region54: #{tpu_custom_call.1} parent=43 // pred_check_branch
          %1296 = sbr.rel (%p1294) target = $region56
        $region55: #{tpu_custom_call.1} parent=43 // pred_region
          %v1297 = vld [vmem:[%s4] sm:$0x1]
          %v1299 = vlaneseq
          %v1300 = vshrl.u32 %v1299, 7
          %v1301 = vsub.s32 0, %v1300
          %v1302 = vrot.slane %v1297, %v1301
          %1303 = vrot.lane.b32.xlu0 %v1302, 96
          %v1304 = vpop.permute.xlu0 %1303
          %v1306 = vmul.f32 %v1287, %v1304
          %1308 = vrot.lane.b32.xlu0 %v1306, 32
          %v1309 = vpop.permute.xlu0 %1308
          %v1311 = vsel %vm334, %v1309, 0.0
          %1312 = vadd.xlane.f32.xlu0 %v1311
          %v1313 = vpop.xlane.xlu0 %1312
          %v1314 = vld [vmem:[#allocation4] sm:$0x1]
          %v1316 = vlaneseq
          %v1317 = vshrl.u32 %v1316, 7
          %v1318 = vsub.s32 0, %v1317
          %v1319 = vrot.slane %v1314, %v1318
          %v1321 = vadd.f32 %v1313, %v1319
          %vm1322 = vcmp.ge.f32.partialorder %v1321, 0.0
          %v1323 = vmul.f32 %v1321, 0.01
          %v1324 = vsel %vm1322, %v1321, %v1323
          %1326 = vset.pattern.permute.xlu0 0
          %1327 = vperm.xlu0 %1326, %v1324
          %v1328 = vpop.permute.xlu0 %1327
          %1330 = vst [vmem:[#allocation8] sm:$0xff] %v1328
        $region56: #{tpu_custom_call.1} parent=43 // pred_fallthru
          _
        // Predicated region
        $region57: #{tpu_custom_call.1} parent=43 // pred_check
          %p1331 = pneg %p177
        $region58: #{tpu_custom_call.1} parent=43 // pred_check_branch
          %1333 = sbr.rel (%p1331) target = $region60
        $region59: #{tpu_custom_call.1} parent=43 // pred_region
          %s1335 = ssub.s32 128, 128
          %1336 = vsyncadd [#allocation7], %s1335
          %s1338 = sshll.u32 [#allocation8], 4
          %s1339 = int_to_ptr.vmem [resolvable:$true] %s1338
          %1341 = dma.vmem_to_hbm [thread:$0]  %s1339, 128, %s6, [#allocation7]
        $region60: #{tpu_custom_call.1} parent=43 // pred_fallthru
          _
        // Predicated region
        $region61: #{tpu_custom_call.1} parent=43 // pred_check
          %p1342 = pneg %p177
        $region62: #{tpu_custom_call.1} parent=43 // pred_check_branch
          %1344 = sbr.rel (%p1342) target = $region64
        $region63: #{tpu_custom_call.1} parent=43 // pred_region
          %1345 = dma.done [#allocation7], 128
        $region64: #{tpu_custom_call.1} parent=43 // pred_fallthru
          _
      $region44: #{tpu_custom_call.1} parent=5 // pred_fallthru
        _
      %p1346 = scmp.le.s32.totalorder 2, %s18
      // Predicated region
      $region65: #{tpu_custom_call.1} parent=5 // pred_check
        %p1347 = pneg %p1346
      $region66: #{tpu_custom_call.1} parent=5 // pred_check_branch
        %1349 = sbr.rel (%p1347) target = $region68
      $region67: #{tpu_custom_call.1} parent=5 // pred_region
        %s1350 = ssub.s32 %s18, 2
      $region68: #{tpu_custom_call.1} parent=5 // pred_fallthru
        _
    $region6: #{tpu_custom_call.1} parent=1 // loop_footer
      %s22 = sadd.s32 1, %s18
    $region7: #{tpu_custom_call.1} parent=1 // loop_footer_branch
      %17 = sbr.rel target = $region3
    $region8: #{tpu_custom_call.1} parent=1 // loop_exit
      _
    %1351 = vsyncpa [#allocation6], 1
    %s1352 = scalar_lea.sflag [#allocation6], 1
    %1353 = vsyncpa %s1352, 1
    %1354 = vsyncpa [#allocation7], 1
    %s1355 = scalar_lea.sflag [#allocation7], 1
    %1356 = vsyncpa %s1355, 1

</llo_original>
